<compile_context>
chip_gen: v7x
topology: tpu7x:2x2x1
jax: 0.10.0
libtpu: 0.0.40
codegen_flags: <defaults>
</compile_context>

<pallas_src>
import functools

import jax
import jax.numpy as jnp
import numpy as np
from jax.experimental import pallas as pl
from jax.experimental.pallas import tpu as pltpu

D_HIDDEN = 768          # classifier is nn.Linear(768, num_class)
LANE = 128              # lane width; classifier output padded to this
SUBLANE = 8             # sublane tile
MAX_ROWS_PER_TILE = 64  # gathered rows per grid step (also = DMA sems per step)


def _round_up(x, m):
    return (x + m - 1) // m * m


def _gather_classify_kernel(row_idx_ref, h_ref, w_ref, b_ref, valid_ref,
                            o_ref, gbuf, sems):
    # row_idx_ref: (M_pad,) int32 SMEM  -- flat row indices into H (B*S, D)
    # h_ref      : (B*S, D)  HBM (pl.ANY) -- transformer hidden states
    # w_ref      : (D, C_PAD) VMEM  -- classifier weight (transposed + padded)
    # b_ref      : (1, C_PAD) VMEM  -- classifier bias (padded)
    # valid_ref  : (TM, 1)   VMEM  -- 1.0 for real utterance rows, else 0.0
    # o_ref      : (TM, C_PAD) VMEM
    # gbuf       : (TM, D)   VMEM scratch for the gathered rows
    # sems       : (TM,)     DMA semaphores
    tm = o_ref.shape[0]
    base = pl.program_id(0) * tm

    # Issue all row-gather DMAs concurrently (only the needed rows leave HBM).
    copies = []
    for j in range(tm):                      # tm is static -> unrolled
        row = row_idx_ref[base + j]
        cp = pltpu.make_async_copy(
            h_ref.at[pl.ds(row, 1), :],      # (1, D) row from HBM
            gbuf.at[pl.ds(j, 1), :],         # (1, D) slot in VMEM scratch
            sems.at[j])
        cp.start()
        copies.append(cp)
    for cp in copies:
        cp.wait()

    # One batched MXU matmul over the whole tile of gathered rows.
    y = jnp.dot(gbuf[...], w_ref[...], preferred_element_type=jnp.float32)
    y = y + b_ref[...]
    # pad_sequence semantics: padded rows = Linear(0) = bias (output-side mask).
    o_ref[...] = jnp.where(valid_ref[...] > 0.0, y, b_ref[...]).astype(o_ref.dtype)


def prepare_classifier_params(W, bias):
    """Hoisted out of the per-call hot path: transpose + lane-pad once."""
    num_class, d = W.shape
    c_pad = _round_up(max(num_class, 1), LANE)
    Wp = jnp.zeros((d, c_pad), jnp.float32).at[:, :num_class].set(W.T.astype(jnp.float32))
    bp = jnp.zeros((1, c_pad), jnp.float32).at[0, :num_class].set(bias.astype(jnp.float32))
    return Wp, bp


@functools.partial(jax.jit, static_argnames=("num_class",))
def full_conv_model_forward(H, utt_pos, lens, Wp, bp, *, num_class):
    """H: (B,S,D) f32; utt_pos: (B,U) i32 (padded with 0); lens: (B,) i32;
    Wp: (D, C_PAD) f32; bp: (1, C_PAD) f32.  Returns (B, U, num_class)."""
    B, S, D = H.shape
    U = utt_pos.shape[1]
    c_pad = Wp.shape[1]

    # Flatten (conversation, utterance) into one M dimension, padded to tiles.
    u_pad = _round_up(U, SUBLANE)
    m = B * u_pad
    tm = m if m <= MAX_ROWS_PER_TILE else MAX_ROWS_PER_TILE
    num_tiles = pl.cdiv(m, tm)
    m_pad = num_tiles * tm

    utt_pad = jnp.zeros((B, u_pad), jnp.int32).at[:, :U].set(utt_pos.astype(jnp.int32))
    # Flat row index into H viewed as (B*S, D); padded rows point at row 0 (masked).
    row_idx = (jnp.arange(B, dtype=jnp.int32)[:, None] * S + utt_pad).reshape(-1)
    valid = (jnp.arange(u_pad, dtype=jnp.int32)[None, :]
             < lens.astype(jnp.int32)[:, None]).astype(jnp.float32).reshape(-1)
    if m_pad > m:
        row_idx = jnp.concatenate([row_idx, jnp.zeros((m_pad - m,), jnp.int32)])
        valid = jnp.concatenate([valid, jnp.zeros((m_pad - m,), jnp.float32)])
    valid2d = valid.reshape(m_pad, 1)

    out = pl.pallas_call(
        _gather_classify_kernel,
        out_shape=jax.ShapeDtypeStruct((m_pad, c_pad), jnp.float32),
        grid_spec=pltpu.PrefetchScalarGridSpec(
            num_scalar_prefetch=1,
            grid=(num_tiles,),
            in_specs=[
                pl.BlockSpec(memory_space=pl.ANY),                # H stays in HBM
                pl.BlockSpec((D, c_pad), lambda i, ri: (0, 0)),   # classifier W
                pl.BlockSpec((1, c_pad), lambda i, ri: (0, 0)),   # classifier bias
                pl.BlockSpec((tm, 1), lambda i, ri: (i, 0)),      # validity mask
            ],
            out_specs=pl.BlockSpec((tm, c_pad), lambda i, ri: (i, 0)),
            scratch_shapes=[
                pltpu.VMEM((tm, D), jnp.float32),
                pltpu.SemaphoreType.DMA((tm,)),
            ],
        ),
        compiler_params=pltpu.CompilerParams(
            dimension_semantics=("parallel",)),   # row tiles are independent
    )(row_idx, H.reshape(B * S, D), Wp, bp, valid2d)

    return out[:m].reshape(B, u_pad, c_pad)[:, :U, :num_class]


if __name__ == "__main__":
    B, S, num_class = 2, 16, 4

    key = jax.random.PRNGKey(0)
    k_h, k_w, k_b = jax.random.split(key, 3)

    # Synthetic transformer output (stands in for transformer(**trans_args).last_hidden_state)
    H = jax.random.normal(k_h, (B, S, D_HIDDEN), dtype=jnp.float32)

    # Deterministic classifier params (nn.Linear(768, num_class) shapes)
    W = jax.random.normal(k_w, (num_class, D_HIDDEN), dtype=jnp.float32) * 0.02
    bias = jax.random.normal(k_b, (num_class,), dtype=jnp.float32) * 0.02

    # Ragged utterance positions per conversation, padded with 0 (valid index)
    lens_np = np.array([3, 5], dtype=np.int32)
    U_MAX = int(lens_np.max())
    utt_pos_np = np.zeros((B, U_MAX), dtype=np.int32)
    utt_pos_np[0, :3] = [2, 7, 11]
    utt_pos_np[1, :5] = [1, 3, 5, 9, 14]

    utt_pos = jnp.asarray(utt_pos_np)
    lens = jnp.asarray(lens_np)

    # Classifier param prep is done once (outside the hot forward path).
    Wp, bp = prepare_classifier_params(W, bias)

    y = full_conv_model_forward(H, utt_pos, lens, Wp, bp, num_class=num_class)
    y = jax.block_until_ready(y)

    # Pure-JAX/numpy reference of get_sent_vectors + pad_sequence + Linear
    H_np = np.asarray(H)
    W_np = np.asarray(W)
    b_np = np.asarray(bias)
    ref = np.zeros((B, U_MAX, num_class), dtype=np.float32)
    for bi in range(B):
        g = np.zeros((U_MAX, D_HIDDEN), dtype=np.float32)
        L = int(lens_np[bi])
        g[:L] = H_np[bi, utt_pos_np[bi, :L], :]
        ref[bi] = g @ W_np.T + b_np

    np.testing.assert_allclose(np.asarray(y), ref, rtol=1e-4, atol=1e-4)
    print("KERNEL_OK")
</pallas_src>

<mosaic_0001>
module attributes {stable_mosaic.version = 11 : i64} {
  func.func @_gather_classify_kernel(%arg0: i32, %arg1: memref<16xi32, #tpu.memory_space<smem>>, %arg2: memref<32x768xf32, #tpu.memory_space<any>>, %arg3: memref<768x128xf32, #tpu.memory_space<vmem>>, %arg4: memref<1x128xf32, #tpu.memory_space<vmem>>, %arg5: memref<16x1xf32, #tpu.memory_space<vmem>>, %arg6: memref<16x128xf32, #tpu.memory_space<vmem>>, %arg7: memref<16x768xf32, #tpu.memory_space<vmem>>, %arg8: memref<16x!tpu.dma_semaphore, #tpu.memory_space<semaphore_mem>>) attributes {dimension_semantics = [#tpu.dimension_semantics<parallel>], iteration_bounds = array<i64: 1>, scalar_prefetch = 1 : i64, scratch_operands = 2 : i64, tpu.core_type = #tpu.core_type<tc>, window_params = [{}, {pipeline_mode = #tpu.pipeline_mode<synchronous>, transform_indices = @transform_1, window_bounds = array<i64: 768, 128>}, {pipeline_mode = #tpu.pipeline_mode<synchronous>, transform_indices = @transform_2, window_bounds = array<i64: 1, 128>}, {transform_indices = @transform_3, window_bounds = array<i64: 16, 1>}, {transform_indices = @transform_4, window_bounds = array<i64: 16, 128>}]} {
    %c16_i32 = arith.constant 16 : i32
    %0 = arith.muli %arg0, %c16_i32 : i32
    %c0_i32 = arith.constant 0 : i32
    %1 = arith.addi %0, %c0_i32 : i32
    %2 = arith.index_cast %1 : i32 to index
    %3 = memref.load %arg1[%2] : memref<16xi32, #tpu.memory_space<smem>>
    %c0_i32_0 = arith.constant 0 : i32
    %c0_i32_1 = arith.constant 0 : i32
    %4 = tpu.memref_slice %arg2[%3, %c0_i32_1] : memref<32x768xf32, #tpu.memory_space<any>> -> memref<1x768xf32, #tpu.memory_space<any>>
    %c0_i32_2 = arith.constant 0 : i32
    %c0_i32_3 = arith.constant 0 : i32
    %5 = tpu.memref_slice %arg7[%c0_i32_2, %c0_i32_3] : memref<16x768xf32, #tpu.memory_space<vmem>> -> memref<1x768xf32, #tpu.memory_space<vmem>>
    %6 = tpu.memref_slice %arg8[%c0_i32_0] : memref<16x!tpu.dma_semaphore, #tpu.memory_space<semaphore_mem>> -> memref<1x!tpu.dma_semaphore, #tpu.memory_space<semaphore_mem>>
    %7 = tpu.memref_squeeze %6 : memref<1x!tpu.dma_semaphore, #tpu.memory_space<semaphore_mem>> -> memref<!tpu.dma_semaphore, #tpu.memory_space<semaphore_mem>>
    tpu.enqueue_dma source(%4 : memref<1x768xf32, #tpu.memory_space<any>>) target(%5 : memref<1x768xf32, #tpu.memory_space<vmem>>) target_semaphore(%7 : memref<!tpu.dma_semaphore, #tpu.memory_space<semaphore_mem>>)
    %c1_i32 = arith.constant 1 : i32
    %8 = arith.addi %0, %c1_i32 : i32
    %9 = arith.index_cast %8 : i32 to index
    %10 = memref.load %arg1[%9] : memref<16xi32, #tpu.memory_space<smem>>
    %c1_i32_4 = arith.constant 1 : i32
    %c0_i32_5 = arith.constant 0 : i32
    %11 = tpu.memref_slice %arg2[%10, %c0_i32_5] : memref<32x768xf32, #tpu.memory_space<any>> -> memref<1x768xf32, #tpu.memory_space<any>>
    %c1_i32_6 = arith.constant 1 : i32
    %c0_i32_7 = arith.constant 0 : i32
    %12 = tpu.memref_slice %arg7[%c1_i32_6, %c0_i32_7] : memref<16x768xf32, #tpu.memory_space<vmem>> -> memref<1x768xf32, #tpu.memory_space<vmem>>
    %13 = tpu.memref_slice %arg8[%c1_i32_4] : memref<16x!tpu.dma_semaphore, #tpu.memory_space<semaphore_mem>> -> memref<1x!tpu.dma_semaphore, #tpu.memory_space<semaphore_mem>>
    %14 = tpu.memref_squeeze %13 : memref<1x!tpu.dma_semaphore, #tpu.memory_space<semaphore_mem>> -> memref<!tpu.dma_semaphore, #tpu.memory_space<semaphore_mem>>
    tpu.enqueue_dma source(%11 : memref<1x768xf32, #tpu.memory_space<any>>) target(%12 : memref<1x768xf32, #tpu.memory_space<vmem>>) target_semaphore(%14 : memref<!tpu.dma_semaphore, #tpu.memory_space<semaphore_mem>>)
    %c2_i32 = arith.constant 2 : i32
    %15 = arith.addi %0, %c2_i32 : i32
    %16 = arith.index_cast %15 : i32 to index
    %17 = memref.load %arg1[%16] : memref<16xi32, #tpu.memory_space<smem>>
    %c2_i32_8 = arith.constant 2 : i32
    %c0_i32_9 = arith.constant 0 : i32
    %18 = tpu.memref_slice %arg2[%17, %c0_i32_9] : memref<32x768xf32, #tpu.memory_space<any>> -> memref<1x768xf32, #tpu.memory_space<any>>
    %c2_i32_10 = arith.constant 2 : i32
    %c0_i32_11 = arith.constant 0 : i32
    %19 = tpu.memref_slice %arg7[%c2_i32_10, %c0_i32_11] : memref<16x768xf32, #tpu.memory_space<vmem>> -> memref<1x768xf32, #tpu.memory_space<vmem>>
    %20 = tpu.memref_slice %arg8[%c2_i32_8] : memref<16x!tpu.dma_semaphore, #tpu.memory_space<semaphore_mem>> -> memref<1x!tpu.dma_semaphore, #tpu.memory_space<semaphore_mem>>
    %21 = tpu.memref_squeeze %20 : memref<1x!tpu.dma_semaphore, #tpu.memory_space<semaphore_mem>> -> memref<!tpu.dma_semaphore, #tpu.memory_space<semaphore_mem>>
    tpu.enqueue_dma source(%18 : memref<1x768xf32, #tpu.memory_space<any>>) target(%19 : memref<1x768xf32, #tpu.memory_space<vmem>>) target_semaphore(%21 : memref<!tpu.dma_semaphore, #tpu.memory_space<semaphore_mem>>)
    %c3_i32 = arith.constant 3 : i32
    %22 = arith.addi %0, %c3_i32 : i32
    %23 = arith.index_cast %22 : i32 to index
    %24 = memref.load %arg1[%23] : memref<16xi32, #tpu.memory_space<smem>>
    %c3_i32_12 = arith.constant 3 : i32
    %c0_i32_13 = arith.constant 0 : i32
    %25 = tpu.memref_slice %arg2[%24, %c0_i32_13] : memref<32x768xf32, #tpu.memory_space<any>> -> memref<1x768xf32, #tpu.memory_space<any>>
    %c3_i32_14 = arith.constant 3 : i32
    %c0_i32_15 = arith.constant 0 : i32
    %26 = tpu.memref_slice %arg7[%c3_i32_14, %c0_i32_15] : memref<16x768xf32, #tpu.memory_space<vmem>> -> memref<1x768xf32, #tpu.memory_space<vmem>>
    %27 = tpu.memref_slice %arg8[%c3_i32_12] : memref<16x!tpu.dma_semaphore, #tpu.memory_space<semaphore_mem>> -> memref<1x!tpu.dma_semaphore, #tpu.memory_space<semaphore_mem>>
    %28 = tpu.memref_squeeze %27 : memref<1x!tpu.dma_semaphore, #tpu.memory_space<semaphore_mem>> -> memref<!tpu.dma_semaphore, #tpu.memory_space<semaphore_mem>>
    tpu.enqueue_dma source(%25 : memref<1x768xf32, #tpu.memory_space<any>>) target(%26 : memref<1x768xf32, #tpu.memory_space<vmem>>) target_semaphore(%28 : memref<!tpu.dma_semaphore, #tpu.memory_space<semaphore_mem>>)
    %c4_i32 = arith.constant 4 : i32
    %29 = arith.addi %0, %c4_i32 : i32
    %30 = arith.index_cast %29 : i32 to index
    %31 = memref.load %arg1[%30] : memref<16xi32, #tpu.memory_space<smem>>
    %c4_i32_16 = arith.constant 4 : i32
    %c0_i32_17 = arith.constant 0 : i32
    %32 = tpu.memref_slice %arg2[%31, %c0_i32_17] : memref<32x768xf32, #tpu.memory_space<any>> -> memref<1x768xf32, #tpu.memory_space<any>>
    %c4_i32_18 = arith.constant 4 : i32
    %c0_i32_19 = arith.constant 0 : i32
    %33 = tpu.memref_slice %arg7[%c4_i32_18, %c0_i32_19] : memref<16x768xf32, #tpu.memory_space<vmem>> -> memref<1x768xf32, #tpu.memory_space<vmem>>
    %34 = tpu.memref_slice %arg8[%c4_i32_16] : memref<16x!tpu.dma_semaphore, #tpu.memory_space<semaphore_mem>> -> memref<1x!tpu.dma_semaphore, #tpu.memory_space<semaphore_mem>>
    %35 = tpu.memref_squeeze %34 : memref<1x!tpu.dma_semaphore, #tpu.memory_space<semaphore_mem>> -> memref<!tpu.dma_semaphore, #tpu.memory_space<semaphore_mem>>
    tpu.enqueue_dma source(%32 : memref<1x768xf32, #tpu.memory_space<any>>) target(%33 : memref<1x768xf32, #tpu.memory_space<vmem>>) target_semaphore(%35 : memref<!tpu.dma_semaphore, #tpu.memory_space<semaphore_mem>>)
    %c5_i32 = arith.constant 5 : i32
    %36 = arith.addi %0, %c5_i32 : i32
    %37 = arith.index_cast %36 : i32 to index
    %38 = memref.load %arg1[%37] : memref<16xi32, #tpu.memory_space<smem>>
    %c5_i32_20 = arith.constant 5 : i32
    %c0_i32_21 = arith.constant 0 : i32
    %39 = tpu.memref_slice %arg2[%38, %c0_i32_21] : memref<32x768xf32, #tpu.memory_space<any>> -> memref<1x768xf32, #tpu.memory_space<any>>
    %c5_i32_22 = arith.constant 5 : i32
    %c0_i32_23 = arith.constant 0 : i32
    %40 = tpu.memref_slice %arg7[%c5_i32_22, %c0_i32_23] : memref<16x768xf32, #tpu.memory_space<vmem>> -> memref<1x768xf32, #tpu.memory_space<vmem>>
    %41 = tpu.memref_slice %arg8[%c5_i32_20] : memref<16x!tpu.dma_semaphore, #tpu.memory_space<semaphore_mem>> -> memref<1x!tpu.dma_semaphore, #tpu.memory_space<semaphore_mem>>
    %42 = tpu.memref_squeeze %41 : memref<1x!tpu.dma_semaphore, #tpu.memory_space<semaphore_mem>> -> memref<!tpu.dma_semaphore, #tpu.memory_space<semaphore_mem>>
    tpu.enqueue_dma source(%39 : memref<1x768xf32, #tpu.memory_space<any>>) target(%40 : memref<1x768xf32, #tpu.memory_space<vmem>>) target_semaphore(%42 : memref<!tpu.dma_semaphore, #tpu.memory_space<semaphore_mem>>)
    %c6_i32 = arith.constant 6 : i32
    %43 = arith.addi %0, %c6_i32 : i32
    %44 = arith.index_cast %43 : i32 to index
    %45 = memref.load %arg1[%44] : memref<16xi32, #tpu.memory_space<smem>>
    %c6_i32_24 = arith.constant 6 : i32
    %c0_i32_25 = arith.constant 0 : i32
    %46 = tpu.memref_slice %arg2[%45, %c0_i32_25] : memref<32x768xf32, #tpu.memory_space<any>> -> memref<1x768xf32, #tpu.memory_space<any>>
    %c6_i32_26 = arith.constant 6 : i32
    %c0_i32_27 = arith.constant 0 : i32
    %47 = tpu.memref_slice %arg7[%c6_i32_26, %c0_i32_27] : memref<16x768xf32, #tpu.memory_space<vmem>> -> memref<1x768xf32, #tpu.memory_space<vmem>>
    %48 = tpu.memref_slice %arg8[%c6_i32_24] : memref<16x!tpu.dma_semaphore, #tpu.memory_space<semaphore_mem>> -> memref<1x!tpu.dma_semaphore, #tpu.memory_space<semaphore_mem>>
    %49 = tpu.memref_squeeze %48 : memref<1x!tpu.dma_semaphore, #tpu.memory_space<semaphore_mem>> -> memref<!tpu.dma_semaphore, #tpu.memory_space<semaphore_mem>>
    tpu.enqueue_dma source(%46 : memref<1x768xf32, #tpu.memory_space<any>>) target(%47 : memref<1x768xf32, #tpu.memory_space<vmem>>) target_semaphore(%49 : memref<!tpu.dma_semaphore, #tpu.memory_space<semaphore_mem>>)
    %c7_i32 = arith.constant 7 : i32
    %50 = arith.addi %0, %c7_i32 : i32
    %51 = arith.index_cast %50 : i32 to index
    %52 = memref.load %arg1[%51] : memref<16xi32, #tpu.memory_space<smem>>
    %c7_i32_28 = arith.constant 7 : i32
    %c0_i32_29 = arith.constant 0 : i32
    %53 = tpu.memref_slice %arg2[%52, %c0_i32_29] : memref<32x768xf32, #tpu.memory_space<any>> -> memref<1x768xf32, #tpu.memory_space<any>>
    %c7_i32_30 = arith.constant 7 : i32
    %c0_i32_31 = arith.constant 0 : i32
    %54 = tpu.memref_slice %arg7[%c7_i32_30, %c0_i32_31] : memref<16x768xf32, #tpu.memory_space<vmem>> -> memref<1x768xf32, #tpu.memory_space<vmem>>
    %55 = tpu.memref_slice %arg8[%c7_i32_28] : memref<16x!tpu.dma_semaphore, #tpu.memory_space<semaphore_mem>> -> memref<1x!tpu.dma_semaphore, #tpu.memory_space<semaphore_mem>>
    %56 = tpu.memref_squeeze %55 : memref<1x!tpu.dma_semaphore, #tpu.memory_space<semaphore_mem>> -> memref<!tpu.dma_semaphore, #tpu.memory_space<semaphore_mem>>
    tpu.enqueue_dma source(%53 : memref<1x768xf32, #tpu.memory_space<any>>) target(%54 : memref<1x768xf32, #tpu.memory_space<vmem>>) target_semaphore(%56 : memref<!tpu.dma_semaphore, #tpu.memory_space<semaphore_mem>>)
    %c8_i32 = arith.constant 8 : i32
    %57 = arith.addi %0, %c8_i32 : i32
    %58 = arith.index_cast %57 : i32 to index
    %59 = memref.load %arg1[%58] : memref<16xi32, #tpu.memory_space<smem>>
    %c8_i32_32 = arith.constant 8 : i32
    %c0_i32_33 = arith.constant 0 : i32
    %60 = tpu.memref_slice %arg2[%59, %c0_i32_33] : memref<32x768xf32, #tpu.memory_space<any>> -> memref<1x768xf32, #tpu.memory_space<any>>
    %c8_i32_34 = arith.constant 8 : i32
    %c0_i32_35 = arith.constant 0 : i32
    %61 = tpu.memref_slice %arg7[%c8_i32_34, %c0_i32_35] : memref<16x768xf32, #tpu.memory_space<vmem>> -> memref<1x768xf32, #tpu.memory_space<vmem>>
    %62 = tpu.memref_slice %arg8[%c8_i32_32] : memref<16x!tpu.dma_semaphore, #tpu.memory_space<semaphore_mem>> -> memref<1x!tpu.dma_semaphore, #tpu.memory_space<semaphore_mem>>
    %63 = tpu.memref_squeeze %62 : memref<1x!tpu.dma_semaphore, #tpu.memory_space<semaphore_mem>> -> memref<!tpu.dma_semaphore, #tpu.memory_space<semaphore_mem>>
    tpu.enqueue_dma source(%60 : memref<1x768xf32, #tpu.memory_space<any>>) target(%61 : memref<1x768xf32, #tpu.memory_space<vmem>>) target_semaphore(%63 : memref<!tpu.dma_semaphore, #tpu.memory_space<semaphore_mem>>)
    %c9_i32 = arith.constant 9 : i32
    %64 = arith.addi %0, %c9_i32 : i32
    %65 = arith.index_cast %64 : i32 to index
    %66 = memref.load %arg1[%65] : memref<16xi32, #tpu.memory_space<smem>>
    %c9_i32_36 = arith.constant 9 : i32
    %c0_i32_37 = arith.constant 0 : i32
    %67 = tpu.memref_slice %arg2[%66, %c0_i32_37] : memref<32x768xf32, #tpu.memory_space<any>> -> memref<1x768xf32, #tpu.memory_space<any>>
    %c9_i32_38 = arith.constant 9 : i32
    %c0_i32_39 = arith.constant 0 : i32
    %68 = tpu.memref_slice %arg7[%c9_i32_38, %c0_i32_39] : memref<16x768xf32, #tpu.memory_space<vmem>> -> memref<1x768xf32, #tpu.memory_space<vmem>>
    %69 = tpu.memref_slice %arg8[%c9_i32_36] : memref<16x!tpu.dma_semaphore, #tpu.memory_space<semaphore_mem>> -> memref<1x!tpu.dma_semaphore, #tpu.memory_space<semaphore_mem>>
    %70 = tpu.memref_squeeze %69 : memref<1x!tpu.dma_semaphore, #tpu.memory_space<semaphore_mem>> -> memref<!tpu.dma_semaphore, #tpu.memory_space<semaphore_mem>>
    tpu.enqueue_dma source(%67 : memref<1x768xf32, #tpu.memory_space<any>>) target(%68 : memref<1x768xf32, #tpu.memory_space<vmem>>) target_semaphore(%70 : memref<!tpu.dma_semaphore, #tpu.memory_space<semaphore_mem>>)
    %c10_i32 = arith.constant 10 : i32
    %71 = arith.addi %0, %c10_i32 : i32
    %72 = arith.index_cast %71 : i32 to index
    %73 = memref.load %arg1[%72] : memref<16xi32, #tpu.memory_space<smem>>
    %c10_i32_40 = arith.constant 10 : i32
    %c0_i32_41 = arith.constant 0 : i32
    %74 = tpu.memref_slice %arg2[%73, %c0_i32_41] : memref<32x768xf32, #tpu.memory_space<any>> -> memref<1x768xf32, #tpu.memory_space<any>>
    %c10_i32_42 = arith.constant 10 : i32
    %c0_i32_43 = arith.constant 0 : i32
    %75 = tpu.memref_slice %arg7[%c10_i32_42, %c0_i32_43] : memref<16x768xf32, #tpu.memory_space<vmem>> -> memref<1x768xf32, #tpu.memory_space<vmem>>
    %76 = tpu.memref_slice %arg8[%c10_i32_40] : memref<16x!tpu.dma_semaphore, #tpu.memory_space<semaphore_mem>> -> memref<1x!tpu.dma_semaphore, #tpu.memory_space<semaphore_mem>>
    %77 = tpu.memref_squeeze %76 : memref<1x!tpu.dma_semaphore, #tpu.memory_space<semaphore_mem>> -> memref<!tpu.dma_semaphore, #tpu.memory_space<semaphore_mem>>
    tpu.enqueue_dma source(%74 : memref<1x768xf32, #tpu.memory_space<any>>) target(%75 : memref<1x768xf32, #tpu.memory_space<vmem>>) target_semaphore(%77 : memref<!tpu.dma_semaphore, #tpu.memory_space<semaphore_mem>>)
    %c11_i32 = arith.constant 11 : i32
    %78 = arith.addi %0, %c11_i32 : i32
    %79 = arith.index_cast %78 : i32 to index
    %80 = memref.load %arg1[%79] : memref<16xi32, #tpu.memory_space<smem>>
    %c11_i32_44 = arith.constant 11 : i32
    %c0_i32_45 = arith.constant 0 : i32
    %81 = tpu.memref_slice %arg2[%80, %c0_i32_45] : memref<32x768xf32, #tpu.memory_space<any>> -> memref<1x768xf32, #tpu.memory_space<any>>
    %c11_i32_46 = arith.constant 11 : i32
    %c0_i32_47 = arith.constant 0 : i32
    %82 = tpu.memref_slice %arg7[%c11_i32_46, %c0_i32_47] : memref<16x768xf32, #tpu.memory_space<vmem>> -> memref<1x768xf32, #tpu.memory_space<vmem>>
    %83 = tpu.memref_slice %arg8[%c11_i32_44] : memref<16x!tpu.dma_semaphore, #tpu.memory_space<semaphore_mem>> -> memref<1x!tpu.dma_semaphore, #tpu.memory_space<semaphore_mem>>
    %84 = tpu.memref_squeeze %83 : memref<1x!tpu.dma_semaphore, #tpu.memory_space<semaphore_mem>> -> memref<!tpu.dma_semaphore, #tpu.memory_space<semaphore_mem>>
    tpu.enqueue_dma source(%81 : memref<1x768xf32, #tpu.memory_space<any>>) target(%82 : memref<1x768xf32, #tpu.memory_space<vmem>>) target_semaphore(%84 : memref<!tpu.dma_semaphore, #tpu.memory_space<semaphore_mem>>)
    %c12_i32 = arith.constant 12 : i32
    %85 = arith.addi %0, %c12_i32 : i32
    %86 = arith.index_cast %85 : i32 to index
    %87 = memref.load %arg1[%86] : memref<16xi32, #tpu.memory_space<smem>>
    %c12_i32_48 = arith.constant 12 : i32
    %c0_i32_49 = arith.constant 0 : i32
    %88 = tpu.memref_slice %arg2[%87, %c0_i32_49] : memref<32x768xf32, #tpu.memory_space<any>> -> memref<1x768xf32, #tpu.memory_space<any>>
    %c12_i32_50 = arith.constant 12 : i32
    %c0_i32_51 = arith.constant 0 : i32
    %89 = tpu.memref_slice %arg7[%c12_i32_50, %c0_i32_51] : memref<16x768xf32, #tpu.memory_space<vmem>> -> memref<1x768xf32, #tpu.memory_space<vmem>>
    %90 = tpu.memref_slice %arg8[%c12_i32_48] : memref<16x!tpu.dma_semaphore, #tpu.memory_space<semaphore_mem>> -> memref<1x!tpu.dma_semaphore, #tpu.memory_space<semaphore_mem>>
    %91 = tpu.memref_squeeze %90 : memref<1x!tpu.dma_semaphore, #tpu.memory_space<semaphore_mem>> -> memref<!tpu.dma_semaphore, #tpu.memory_space<semaphore_mem>>
    tpu.enqueue_dma source(%88 : memref<1x768xf32, #tpu.memory_space<any>>) target(%89 : memref<1x768xf32, #tpu.memory_space<vmem>>) target_semaphore(%91 : memref<!tpu.dma_semaphore, #tpu.memory_space<semaphore_mem>>)
    %c13_i32 = arith.constant 13 : i32
    %92 = arith.addi %0, %c13_i32 : i32
    %93 = arith.index_cast %92 : i32 to index
    %94 = memref.load %arg1[%93] : memref<16xi32, #tpu.memory_space<smem>>
    %c13_i32_52 = arith.constant 13 : i32
    %c0_i32_53 = arith.constant 0 : i32
    %95 = tpu.memref_slice %arg2[%94, %c0_i32_53] : memref<32x768xf32, #tpu.memory_space<any>> -> memref<1x768xf32, #tpu.memory_space<any>>
    %c13_i32_54 = arith.constant 13 : i32
    %c0_i32_55 = arith.constant 0 : i32
    %96 = tpu.memref_slice %arg7[%c13_i32_54, %c0_i32_55] : memref<16x768xf32, #tpu.memory_space<vmem>> -> memref<1x768xf32, #tpu.memory_space<vmem>>
    %97 = tpu.memref_slice %arg8[%c13_i32_52] : memref<16x!tpu.dma_semaphore, #tpu.memory_space<semaphore_mem>> -> memref<1x!tpu.dma_semaphore, #tpu.memory_space<semaphore_mem>>
    %98 = tpu.memref_squeeze %97 : memref<1x!tpu.dma_semaphore, #tpu.memory_space<semaphore_mem>> -> memref<!tpu.dma_semaphore, #tpu.memory_space<semaphore_mem>>
    tpu.enqueue_dma source(%95 : memref<1x768xf32, #tpu.memory_space<any>>) target(%96 : memref<1x768xf32, #tpu.memory_space<vmem>>) target_semaphore(%98 : memref<!tpu.dma_semaphore, #tpu.memory_space<semaphore_mem>>)
    %c14_i32 = arith.constant 14 : i32
    %99 = arith.addi %0, %c14_i32 : i32
    %100 = arith.index_cast %99 : i32 to index
    %101 = memref.load %arg1[%100] : memref<16xi32, #tpu.memory_space<smem>>
    %c14_i32_56 = arith.constant 14 : i32
    %c0_i32_57 = arith.constant 0 : i32
    %102 = tpu.memref_slice %arg2[%101, %c0_i32_57] : memref<32x768xf32, #tpu.memory_space<any>> -> memref<1x768xf32, #tpu.memory_space<any>>
    %c14_i32_58 = arith.constant 14 : i32
    %c0_i32_59 = arith.constant 0 : i32
    %103 = tpu.memref_slice %arg7[%c14_i32_58, %c0_i32_59] : memref<16x768xf32, #tpu.memory_space<vmem>> -> memref<1x768xf32, #tpu.memory_space<vmem>>
    %104 = tpu.memref_slice %arg8[%c14_i32_56] : memref<16x!tpu.dma_semaphore, #tpu.memory_space<semaphore_mem>> -> memref<1x!tpu.dma_semaphore, #tpu.memory_space<semaphore_mem>>
    %105 = tpu.memref_squeeze %104 : memref<1x!tpu.dma_semaphore, #tpu.memory_space<semaphore_mem>> -> memref<!tpu.dma_semaphore, #tpu.memory_space<semaphore_mem>>
    tpu.enqueue_dma source(%102 : memref<1x768xf32, #tpu.memory_space<any>>) target(%103 : memref<1x768xf32, #tpu.memory_space<vmem>>) target_semaphore(%105 : memref<!tpu.dma_semaphore, #tpu.memory_space<semaphore_mem>>)
    %c15_i32 = arith.constant 15 : i32
    %106 = arith.addi %0, %c15_i32 : i32
    %107 = arith.index_cast %106 : i32 to index
    %108 = memref.load %arg1[%107] : memref<16xi32, #tpu.memory_space<smem>>
    %c15_i32_60 = arith.constant 15 : i32
    %c0_i32_61 = arith.constant 0 : i32
    %109 = tpu.memref_slice %arg2[%108, %c0_i32_61] : memref<32x768xf32, #tpu.memory_space<any>> -> memref<1x768xf32, #tpu.memory_space<any>>
    %c15_i32_62 = arith.constant 15 : i32
    %c0_i32_63 = arith.constant 0 : i32
    %110 = tpu.memref_slice %arg7[%c15_i32_62, %c0_i32_63] : memref<16x768xf32, #tpu.memory_space<vmem>> -> memref<1x768xf32, #tpu.memory_space<vmem>>
    %111 = tpu.memref_slice %arg8[%c15_i32_60] : memref<16x!tpu.dma_semaphore, #tpu.memory_space<semaphore_mem>> -> memref<1x!tpu.dma_semaphore, #tpu.memory_space<semaphore_mem>>
    %112 = tpu.memref_squeeze %111 : memref<1x!tpu.dma_semaphore, #tpu.memory_space<semaphore_mem>> -> memref<!tpu.dma_semaphore, #tpu.memory_space<semaphore_mem>>
    tpu.enqueue_dma source(%109 : memref<1x768xf32, #tpu.memory_space<any>>) target(%110 : memref<1x768xf32, #tpu.memory_space<vmem>>) target_semaphore(%112 : memref<!tpu.dma_semaphore, #tpu.memory_space<semaphore_mem>>)
    %c0_i32_64 = arith.constant 0 : i32
    %c0_i32_65 = arith.constant 0 : i32
    %113 = tpu.memref_slice %arg2[%3, %c0_i32_65] : memref<32x768xf32, #tpu.memory_space<any>> -> memref<1x768xf32, #tpu.memory_space<any>>
    %c0_i32_66 = arith.constant 0 : i32
    %c0_i32_67 = arith.constant 0 : i32
    %114 = tpu.memref_slice %arg7[%c0_i32_66, %c0_i32_67] : memref<16x768xf32, #tpu.memory_space<vmem>> -> memref<1x768xf32, #tpu.memory_space<vmem>>
    %115 = tpu.memref_slice %arg8[%c0_i32_64] : memref<16x!tpu.dma_semaphore, #tpu.memory_space<semaphore_mem>> -> memref<1x!tpu.dma_semaphore, #tpu.memory_space<semaphore_mem>>
    %116 = tpu.memref_squeeze %115 : memref<1x!tpu.dma_semaphore, #tpu.memory_space<semaphore_mem>> -> memref<!tpu.dma_semaphore, #tpu.memory_space<semaphore_mem>>
    tpu.wait_dma2 semaphore(%116 : memref<!tpu.dma_semaphore, #tpu.memory_space<semaphore_mem>>) src(%113 : memref<1x768xf32, #tpu.memory_space<any>>) dst(%114 : memref<1x768xf32, #tpu.memory_space<vmem>>)
    %c1_i32_68 = arith.constant 1 : i32
    %c0_i32_69 = arith.constant 0 : i32
    %117 = tpu.memref_slice %arg2[%10, %c0_i32_69] : memref<32x768xf32, #tpu.memory_space<any>> -> memref<1x768xf32, #tpu.memory_space<any>>
    %c1_i32_70 = arith.constant 1 : i32
    %c0_i32_71 = arith.constant 0 : i32
    %118 = tpu.memref_slice %arg7[%c1_i32_70, %c0_i32_71] : memref<16x768xf32, #tpu.memory_space<vmem>> -> memref<1x768xf32, #tpu.memory_space<vmem>>
    %119 = tpu.memref_slice %arg8[%c1_i32_68] : memref<16x!tpu.dma_semaphore, #tpu.memory_space<semaphore_mem>> -> memref<1x!tpu.dma_semaphore, #tpu.memory_space<semaphore_mem>>
    %120 = tpu.memref_squeeze %119 : memref<1x!tpu.dma_semaphore, #tpu.memory_space<semaphore_mem>> -> memref<!tpu.dma_semaphore, #tpu.memory_space<semaphore_mem>>
    tpu.wait_dma2 semaphore(%120 : memref<!tpu.dma_semaphore, #tpu.memory_space<semaphore_mem>>) src(%117 : memref<1x768xf32, #tpu.memory_space<any>>) dst(%118 : memref<1x768xf32, #tpu.memory_space<vmem>>)
    %c2_i32_72 = arith.constant 2 : i32
    %c0_i32_73 = arith.constant 0 : i32
    %121 = tpu.memref_slice %arg2[%17, %c0_i32_73] : memref<32x768xf32, #tpu.memory_space<any>> -> memref<1x768xf32, #tpu.memory_space<any>>
    %c2_i32_74 = arith.constant 2 : i32
    %c0_i32_75 = arith.constant 0 : i32
    %122 = tpu.memref_slice %arg7[%c2_i32_74, %c0_i32_75] : memref<16x768xf32, #tpu.memory_space<vmem>> -> memref<1x768xf32, #tpu.memory_space<vmem>>
    %123 = tpu.memref_slice %arg8[%c2_i32_72] : memref<16x!tpu.dma_semaphore, #tpu.memory_space<semaphore_mem>> -> memref<1x!tpu.dma_semaphore, #tpu.memory_space<semaphore_mem>>
    %124 = tpu.memref_squeeze %123 : memref<1x!tpu.dma_semaphore, #tpu.memory_space<semaphore_mem>> -> memref<!tpu.dma_semaphore, #tpu.memory_space<semaphore_mem>>
    tpu.wait_dma2 semaphore(%124 : memref<!tpu.dma_semaphore, #tpu.memory_space<semaphore_mem>>) src(%121 : memref<1x768xf32, #tpu.memory_space<any>>) dst(%122 : memref<1x768xf32, #tpu.memory_space<vmem>>)
    %c3_i32_76 = arith.constant 3 : i32
    %c0_i32_77 = arith.constant 0 : i32
    %125 = tpu.memref_slice %arg2[%24, %c0_i32_77] : memref<32x768xf32, #tpu.memory_space<any>> -> memref<1x768xf32, #tpu.memory_space<any>>
    %c3_i32_78 = arith.constant 3 : i32
    %c0_i32_79 = arith.constant 0 : i32
    %126 = tpu.memref_slice %arg7[%c3_i32_78, %c0_i32_79] : memref<16x768xf32, #tpu.memory_space<vmem>> -> memref<1x768xf32, #tpu.memory_space<vmem>>
    %127 = tpu.memref_slice %arg8[%c3_i32_76] : memref<16x!tpu.dma_semaphore, #tpu.memory_space<semaphore_mem>> -> memref<1x!tpu.dma_semaphore, #tpu.memory_space<semaphore_mem>>
    %128 = tpu.memref_squeeze %127 : memref<1x!tpu.dma_semaphore, #tpu.memory_space<semaphore_mem>> -> memref<!tpu.dma_semaphore, #tpu.memory_space<semaphore_mem>>
    tpu.wait_dma2 semaphore(%128 : memref<!tpu.dma_semaphore, #tpu.memory_space<semaphore_mem>>) src(%125 : memref<1x768xf32, #tpu.memory_space<any>>) dst(%126 : memref<1x768xf32, #tpu.memory_space<vmem>>)
    %c4_i32_80 = arith.constant 4 : i32
    %c0_i32_81 = arith.constant 0 : i32
    %129 = tpu.memref_slice %arg2[%31, %c0_i32_81] : memref<32x768xf32, #tpu.memory_space<any>> -> memref<1x768xf32, #tpu.memory_space<any>>
    %c4_i32_82 = arith.constant 4 : i32
    %c0_i32_83 = arith.constant 0 : i32
    %130 = tpu.memref_slice %arg7[%c4_i32_82, %c0_i32_83] : memref<16x768xf32, #tpu.memory_space<vmem>> -> memref<1x768xf32, #tpu.memory_space<vmem>>
    %131 = tpu.memref_slice %arg8[%c4_i32_80] : memref<16x!tpu.dma_semaphore, #tpu.memory_space<semaphore_mem>> -> memref<1x!tpu.dma_semaphore, #tpu.memory_space<semaphore_mem>>
    %132 = tpu.memref_squeeze %131 : memref<1x!tpu.dma_semaphore, #tpu.memory_space<semaphore_mem>> -> memref<!tpu.dma_semaphore, #tpu.memory_space<semaphore_mem>>
    tpu.wait_dma2 semaphore(%132 : memref<!tpu.dma_semaphore, #tpu.memory_space<semaphore_mem>>) src(%129 : memref<1x768xf32, #tpu.memory_space<any>>) dst(%130 : memref<1x768xf32, #tpu.memory_space<vmem>>)
    %c5_i32_84 = arith.constant 5 : i32
    %c0_i32_85 = arith.constant 0 : i32
    %133 = tpu.memref_slice %arg2[%38, %c0_i32_85] : memref<32x768xf32, #tpu.memory_space<any>> -> memref<1x768xf32, #tpu.memory_space<any>>
    %c5_i32_86 = arith.constant 5 : i32
    %c0_i32_87 = arith.constant 0 : i32
    %134 = tpu.memref_slice %arg7[%c5_i32_86, %c0_i32_87] : memref<16x768xf32, #tpu.memory_space<vmem>> -> memref<1x768xf32, #tpu.memory_space<vmem>>
    %135 = tpu.memref_slice %arg8[%c5_i32_84] : memref<16x!tpu.dma_semaphore, #tpu.memory_space<semaphore_mem>> -> memref<1x!tpu.dma_semaphore, #tpu.memory_space<semaphore_mem>>
    %136 = tpu.memref_squeeze %135 : memref<1x!tpu.dma_semaphore, #tpu.memory_space<semaphore_mem>> -> memref<!tpu.dma_semaphore, #tpu.memory_space<semaphore_mem>>
    tpu.wait_dma2 semaphore(%136 : memref<!tpu.dma_semaphore, #tpu.memory_space<semaphore_mem>>) src(%133 : memref<1x768xf32, #tpu.memory_space<any>>) dst(%134 : memref<1x768xf32, #tpu.memory_space<vmem>>)
    %c6_i32_88 = arith.constant 6 : i32
    %c0_i32_89 = arith.constant 0 : i32
    %137 = tpu.memref_slice %arg2[%45, %c0_i32_89] : memref<32x768xf32, #tpu.memory_space<any>> -> memref<1x768xf32, #tpu.memory_space<any>>
    %c6_i32_90 = arith.constant 6 : i32
    %c0_i32_91 = arith.constant 0 : i32
    %138 = tpu.memref_slice %arg7[%c6_i32_90, %c0_i32_91] : memref<16x768xf32, #tpu.memory_space<vmem>> -> memref<1x768xf32, #tpu.memory_space<vmem>>
    %139 = tpu.memref_slice %arg8[%c6_i32_88] : memref<16x!tpu.dma_semaphore, #tpu.memory_space<semaphore_mem>> -> memref<1x!tpu.dma_semaphore, #tpu.memory_space<semaphore_mem>>
    %140 = tpu.memref_squeeze %139 : memref<1x!tpu.dma_semaphore, #tpu.memory_space<semaphore_mem>> -> memref<!tpu.dma_semaphore, #tpu.memory_space<semaphore_mem>>
    tpu.wait_dma2 semaphore(%140 : memref<!tpu.dma_semaphore, #tpu.memory_space<semaphore_mem>>) src(%137 : memref<1x768xf32, #tpu.memory_space<any>>) dst(%138 : memref<1x768xf32, #tpu.memory_space<vmem>>)
    %c7_i32_92 = arith.constant 7 : i32
    %c0_i32_93 = arith.constant 0 : i32
    %141 = tpu.memref_slice %arg2[%52, %c0_i32_93] : memref<32x768xf32, #tpu.memory_space<any>> -> memref<1x768xf32, #tpu.memory_space<any>>
    %c7_i32_94 = arith.constant 7 : i32
    %c0_i32_95 = arith.constant 0 : i32
    %142 = tpu.memref_slice %arg7[%c7_i32_94, %c0_i32_95] : memref<16x768xf32, #tpu.memory_space<vmem>> -> memref<1x768xf32, #tpu.memory_space<vmem>>
    %143 = tpu.memref_slice %arg8[%c7_i32_92] : memref<16x!tpu.dma_semaphore, #tpu.memory_space<semaphore_mem>> -> memref<1x!tpu.dma_semaphore, #tpu.memory_space<semaphore_mem>>
    %144 = tpu.memref_squeeze %143 : memref<1x!tpu.dma_semaphore, #tpu.memory_space<semaphore_mem>> -> memref<!tpu.dma_semaphore, #tpu.memory_space<semaphore_mem>>
    tpu.wait_dma2 semaphore(%144 : memref<!tpu.dma_semaphore, #tpu.memory_space<semaphore_mem>>) src(%141 : memref<1x768xf32, #tpu.memory_space<any>>) dst(%142 : memref<1x768xf32, #tpu.memory_space<vmem>>)
    %c8_i32_96 = arith.constant 8 : i32
    %c0_i32_97 = arith.constant 0 : i32
    %145 = tpu.memref_slice %arg2[%59, %c0_i32_97] : memref<32x768xf32, #tpu.memory_space<any>> -> memref<1x768xf32, #tpu.memory_space<any>>
    %c8_i32_98 = arith.constant 8 : i32
    %c0_i32_99 = arith.constant 0 : i32
    %146 = tpu.memref_slice %arg7[%c8_i32_98, %c0_i32_99] : memref<16x768xf32, #tpu.memory_space<vmem>> -> memref<1x768xf32, #tpu.memory_space<vmem>>
    %147 = tpu.memref_slice %arg8[%c8_i32_96] : memref<16x!tpu.dma_semaphore, #tpu.memory_space<semaphore_mem>> -> memref<1x!tpu.dma_semaphore, #tpu.memory_space<semaphore_mem>>
    %148 = tpu.memref_squeeze %147 : memref<1x!tpu.dma_semaphore, #tpu.memory_space<semaphore_mem>> -> memref<!tpu.dma_semaphore, #tpu.memory_space<semaphore_mem>>
    tpu.wait_dma2 semaphore(%148 : memref<!tpu.dma_semaphore, #tpu.memory_space<semaphore_mem>>) src(%145 : memref<1x768xf32, #tpu.memory_space<any>>) dst(%146 : memref<1x768xf32, #tpu.memory_space<vmem>>)
    %c9_i32_100 = arith.constant 9 : i32
    %c0_i32_101 = arith.constant 0 : i32
    %149 = tpu.memref_slice %arg2[%66, %c0_i32_101] : memref<32x768xf32, #tpu.memory_space<any>> -> memref<1x768xf32, #tpu.memory_space<any>>
    %c9_i32_102 = arith.constant 9 : i32
    %c0_i32_103 = arith.constant 0 : i32
    %150 = tpu.memref_slice %arg7[%c9_i32_102, %c0_i32_103] : memref<16x768xf32, #tpu.memory_space<vmem>> -> memref<1x768xf32, #tpu.memory_space<vmem>>
    %151 = tpu.memref_slice %arg8[%c9_i32_100] : memref<16x!tpu.dma_semaphore, #tpu.memory_space<semaphore_mem>> -> memref<1x!tpu.dma_semaphore, #tpu.memory_space<semaphore_mem>>
    %152 = tpu.memref_squeeze %151 : memref<1x!tpu.dma_semaphore, #tpu.memory_space<semaphore_mem>> -> memref<!tpu.dma_semaphore, #tpu.memory_space<semaphore_mem>>
    tpu.wait_dma2 semaphore(%152 : memref<!tpu.dma_semaphore, #tpu.memory_space<semaphore_mem>>) src(%149 : memref<1x768xf32, #tpu.memory_space<any>>) dst(%150 : memref<1x768xf32, #tpu.memory_space<vmem>>)
    %c10_i32_104 = arith.constant 10 : i32
    %c0_i32_105 = arith.constant 0 : i32
    %153 = tpu.memref_slice %arg2[%73, %c0_i32_105] : memref<32x768xf32, #tpu.memory_space<any>> -> memref<1x768xf32, #tpu.memory_space<any>>
    %c10_i32_106 = arith.constant 10 : i32
    %c0_i32_107 = arith.constant 0 : i32
    %154 = tpu.memref_slice %arg7[%c10_i32_106, %c0_i32_107] : memref<16x768xf32, #tpu.memory_space<vmem>> -> memref<1x768xf32, #tpu.memory_space<vmem>>
    %155 = tpu.memref_slice %arg8[%c10_i32_104] : memref<16x!tpu.dma_semaphore, #tpu.memory_space<semaphore_mem>> -> memref<1x!tpu.dma_semaphore, #tpu.memory_space<semaphore_mem>>
    %156 = tpu.memref_squeeze %155 : memref<1x!tpu.dma_semaphore, #tpu.memory_space<semaphore_mem>> -> memref<!tpu.dma_semaphore, #tpu.memory_space<semaphore_mem>>
    tpu.wait_dma2 semaphore(%156 : memref<!tpu.dma_semaphore, #tpu.memory_space<semaphore_mem>>) src(%153 : memref<1x768xf32, #tpu.memory_space<any>>) dst(%154 : memref<1x768xf32, #tpu.memory_space<vmem>>)
    %c11_i32_108 = arith.constant 11 : i32
    %c0_i32_109 = arith.constant 0 : i32
    %157 = tpu.memref_slice %arg2[%80, %c0_i32_109] : memref<32x768xf32, #tpu.memory_space<any>> -> memref<1x768xf32, #tpu.memory_space<any>>
    %c11_i32_110 = arith.constant 11 : i32
    %c0_i32_111 = arith.constant 0 : i32
    %158 = tpu.memref_slice %arg7[%c11_i32_110, %c0_i32_111] : memref<16x768xf32, #tpu.memory_space<vmem>> -> memref<1x768xf32, #tpu.memory_space<vmem>>
    %159 = tpu.memref_slice %arg8[%c11_i32_108] : memref<16x!tpu.dma_semaphore, #tpu.memory_space<semaphore_mem>> -> memref<1x!tpu.dma_semaphore, #tpu.memory_space<semaphore_mem>>
    %160 = tpu.memref_squeeze %159 : memref<1x!tpu.dma_semaphore, #tpu.memory_space<semaphore_mem>> -> memref<!tpu.dma_semaphore, #tpu.memory_space<semaphore_mem>>
    tpu.wait_dma2 semaphore(%160 : memref<!tpu.dma_semaphore, #tpu.memory_space<semaphore_mem>>) src(%157 : memref<1x768xf32, #tpu.memory_space<any>>) dst(%158 : memref<1x768xf32, #tpu.memory_space<vmem>>)
    %c12_i32_112 = arith.constant 12 : i32
    %c0_i32_113 = arith.constant 0 : i32
    %161 = tpu.memref_slice %arg2[%87, %c0_i32_113] : memref<32x768xf32, #tpu.memory_space<any>> -> memref<1x768xf32, #tpu.memory_space<any>>
    %c12_i32_114 = arith.constant 12 : i32
    %c0_i32_115 = arith.constant 0 : i32
    %162 = tpu.memref_slice %arg7[%c12_i32_114, %c0_i32_115] : memref<16x768xf32, #tpu.memory_space<vmem>> -> memref<1x768xf32, #tpu.memory_space<vmem>>
    %163 = tpu.memref_slice %arg8[%c12_i32_112] : memref<16x!tpu.dma_semaphore, #tpu.memory_space<semaphore_mem>> -> memref<1x!tpu.dma_semaphore, #tpu.memory_space<semaphore_mem>>
    %164 = tpu.memref_squeeze %163 : memref<1x!tpu.dma_semaphore, #tpu.memory_space<semaphore_mem>> -> memref<!tpu.dma_semaphore, #tpu.memory_space<semaphore_mem>>
    tpu.wait_dma2 semaphore(%164 : memref<!tpu.dma_semaphore, #tpu.memory_space<semaphore_mem>>) src(%161 : memref<1x768xf32, #tpu.memory_space<any>>) dst(%162 : memref<1x768xf32, #tpu.memory_space<vmem>>)
    %c13_i32_116 = arith.constant 13 : i32
    %c0_i32_117 = arith.constant 0 : i32
    %165 = tpu.memref_slice %arg2[%94, %c0_i32_117] : memref<32x768xf32, #tpu.memory_space<any>> -> memref<1x768xf32, #tpu.memory_space<any>>
    %c13_i32_118 = arith.constant 13 : i32
    %c0_i32_119 = arith.constant 0 : i32
    %166 = tpu.memref_slice %arg7[%c13_i32_118, %c0_i32_119] : memref<16x768xf32, #tpu.memory_space<vmem>> -> memref<1x768xf32, #tpu.memory_space<vmem>>
    %167 = tpu.memref_slice %arg8[%c13_i32_116] : memref<16x!tpu.dma_semaphore, #tpu.memory_space<semaphore_mem>> -> memref<1x!tpu.dma_semaphore, #tpu.memory_space<semaphore_mem>>
    %168 = tpu.memref_squeeze %167 : memref<1x!tpu.dma_semaphore, #tpu.memory_space<semaphore_mem>> -> memref<!tpu.dma_semaphore, #tpu.memory_space<semaphore_mem>>
    tpu.wait_dma2 semaphore(%168 : memref<!tpu.dma_semaphore, #tpu.memory_space<semaphore_mem>>) src(%165 : memref<1x768xf32, #tpu.memory_space<any>>) dst(%166 : memref<1x768xf32, #tpu.memory_space<vmem>>)
    %c14_i32_120 = arith.constant 14 : i32
    %c0_i32_121 = arith.constant 0 : i32
    %169 = tpu.memref_slice %arg2[%101, %c0_i32_121] : memref<32x768xf32, #tpu.memory_space<any>> -> memref<1x768xf32, #tpu.memory_space<any>>
    %c14_i32_122 = arith.constant 14 : i32
    %c0_i32_123 = arith.constant 0 : i32
    %170 = tpu.memref_slice %arg7[%c14_i32_122, %c0_i32_123] : memref<16x768xf32, #tpu.memory_space<vmem>> -> memref<1x768xf32, #tpu.memory_space<vmem>>
    %171 = tpu.memref_slice %arg8[%c14_i32_120] : memref<16x!tpu.dma_semaphore, #tpu.memory_space<semaphore_mem>> -> memref<1x!tpu.dma_semaphore, #tpu.memory_space<semaphore_mem>>
    %172 = tpu.memref_squeeze %171 : memref<1x!tpu.dma_semaphore, #tpu.memory_space<semaphore_mem>> -> memref<!tpu.dma_semaphore, #tpu.memory_space<semaphore_mem>>
    tpu.wait_dma2 semaphore(%172 : memref<!tpu.dma_semaphore, #tpu.memory_space<semaphore_mem>>) src(%169 : memref<1x768xf32, #tpu.memory_space<any>>) dst(%170 : memref<1x768xf32, #tpu.memory_space<vmem>>)
    %c15_i32_124 = arith.constant 15 : i32
    %c0_i32_125 = arith.constant 0 : i32
    %173 = tpu.memref_slice %arg2[%108, %c0_i32_125] : memref<32x768xf32, #tpu.memory_space<any>> -> memref<1x768xf32, #tpu.memory_space<any>>
    %c15_i32_126 = arith.constant 15 : i32
    %c0_i32_127 = arith.constant 0 : i32
    %174 = tpu.memref_slice %arg7[%c15_i32_126, %c0_i32_127] : memref<16x768xf32, #tpu.memory_space<vmem>> -> memref<1x768xf32, #tpu.memory_space<vmem>>
    %175 = tpu.memref_slice %arg8[%c15_i32_124] : memref<16x!tpu.dma_semaphore, #tpu.memory_space<semaphore_mem>> -> memref<1x!tpu.dma_semaphore, #tpu.memory_space<semaphore_mem>>
    %176 = tpu.memref_squeeze %175 : memref<1x!tpu.dma_semaphore, #tpu.memory_space<semaphore_mem>> -> memref<!tpu.dma_semaphore, #tpu.memory_space<semaphore_mem>>
    tpu.wait_dma2 semaphore(%176 : memref<!tpu.dma_semaphore, #tpu.memory_space<semaphore_mem>>) src(%173 : memref<1x768xf32, #tpu.memory_space<any>>) dst(%174 : memref<1x768xf32, #tpu.memory_space<vmem>>)
    %c0 = arith.constant 0 : index
    %c0_128 = arith.constant 0 : index
    %177 = vector.load %arg7[%c0, %c0_128] : memref<16x768xf32, #tpu.memory_space<vmem>>, vector<16x768xf32>
    %c0_129 = arith.constant 0 : index
    %c0_130 = arith.constant 0 : index
    %178 = vector.load %arg3[%c0_129, %c0_130] : memref<768x128xf32, #tpu.memory_space<vmem>>, vector<768x128xf32>
    %cst = arith.constant dense<0.000000e+00> : vector<16x128xf32>
    %179 = tpu.matmul %177, %178, %cst {dimension_numbers = #tpu.dot_dimension_numbers<[1], [0], [0], [1], [0, 0, 1, 1], [], []>} : vector<16x768xf32>, vector<768x128xf32>, vector<16x128xf32> -> vector<16x128xf32>
    %c0_131 = arith.constant 0 : index
    %c0_132 = arith.constant 0 : index
    %180 = vector.load %arg4[%c0_131, %c0_132] : memref<1x128xf32, #tpu.memory_space<vmem>>, vector<1x128xf32>
    %181 = vector.broadcast %180 : vector<1x128xf32> to vector<16x128xf32>
    %182 = arith.addf %179, %181 : vector<16x128xf32>
    %c0_133 = arith.constant 0 : index
    %c0_134 = arith.constant 0 : index
    %183 = vector.load %arg5[%c0_133, %c0_134] : memref<16x1xf32, #tpu.memory_space<vmem>>, vector<16x1xf32>
    %cst_135 = arith.constant 0.000000e+00 : f32
    %184 = vector.broadcast %cst_135 : f32 to vector<16x1xf32>
    %185 = arith.cmpf ogt, %183, %184 : vector<16x1xf32>
    %c0_136 = arith.constant 0 : index
    %c0_137 = arith.constant 0 : index
    %186 = vector.load %arg4[%c0_136, %c0_137] : memref<1x128xf32, #tpu.memory_space<vmem>>, vector<1x128xf32>
    %187 = vector.shape_cast %185 : vector<16x1xi1> to vector<16x1xi1>
    %188 = vector.broadcast %187 : vector<16x1xi1> to vector<16x128xi1>
    %189 = vector.shape_cast %186 : vector<1x128xf32> to vector<1x128xf32>
    %190 = vector.broadcast %189 : vector<1x128xf32> to vector<16x128xf32>
    %191 = arith.select %188, %182, %190 : vector<16x128xi1>, vector<16x128xf32>
    %c0_138 = arith.constant 0 : index
    %c0_139 = arith.constant 0 : index
    %192 = vector.load %arg6[%c0_138, %c0_139] : memref<16x128xf32, #tpu.memory_space<vmem>>, vector<16x128xf32>
    tpu.vector_store %arg6[%c0_138, %c0_139], %191 {strides = array<i32>} : memref<16x128xf32, #tpu.memory_space<vmem>>, vector<16x128xf32>,
    return
  }
  func.func @transform_1(%arg0: i32, %arg1: memref<16xi32, #tpu.memory_space<smem>>) -> (i32, i32) {
    %c0_i32 = arith.constant 0 : i32
    %c0_i32_0 = arith.constant 0 : i32
    %c0_i32_1 = arith.constant 0 : i32
    return %c0_i32, %c0_i32_0 : i32, i32
  }
  func.func @transform_2(%arg0: i32, %arg1: memref<16xi32, #tpu.memory_space<smem>>) -> (i32, i32) {
    %c0_i32 = arith.constant 0 : i32
    %c0_i32_0 = arith.constant 0 : i32
    %c0_i32_1 = arith.constant 0 : i32
    return %c0_i32, %c0_i32_0 : i32, i32
  }
  func.func @transform_3(%arg0: i32, %arg1: memref<16xi32, #tpu.memory_space<smem>>) -> (i32, i32) {
    %c0_i32 = arith.constant 0 : i32
    %c0_i32_0 = arith.constant 0 : i32
    return %arg0, %c0_i32 : i32, i32
  }
  func.func @transform_4(%arg0: i32, %arg1: memref<16xi32, #tpu.memory_space<smem>>) -> (i32, i32) {
    %c0_i32 = arith.constant 0 : i32
    %c0_i32_0 = arith.constant 0 : i32
    return %arg0, %c0_i32 : i32, i32
  }
}

</mosaic_0001>

<llo_original>
// kernel: full_conv_model_forward.1
$region0: #{full_conv_model_forward.1}
  #allocation0 [shape = 'u32[]', space=smem, size = 0x4, offset = 0x4, fixed_abs, tag = 'smem constant byte address 0x4 - core index']
  #allocation1 [shape = 'u32[144,128]{1,0:T(1,128)}', space=vmem, size = 0x12000, scoped, tag = 'internal scratch']
  #allocation2 [shape = 'f32[16,768]{1,0:T(8,128)}', space=vmem, size = 0xc000, scoped, tag = 'scratch operand']
  #allocation3 [shape = 's32[16]{0}', space=sflag, size = 0x40, scoped, tag = 'scratch operand']
  #allocation4 [shape = 's32[1]{0}', space=sflag, size = 0x4, scoped, tag = 'scoped memory for full_conv_model_forward.1']
  #allocation5 [shape = 'u8[512]{0}', space=smem, size = 0x200, scoped, tag = 'prefetched SMEM operand 0']
  #allocation8 [shape = 's32[]', space=sflag, size = 0x4, offset = 0, fixed_abs, tag = 'sflag constant byte address 0x0 - dummy sync flag']
  #allocation9 [shape = 's32[]', space=sflag, size = 0x4, offset = 0, fixed_abs, tag = 'sflag constant byte address 0x0 - dummy sync flag']
  #allocation10 [shape = 's32[]', space=sflag, size = 0x4, offset = 0, fixed_abs, tag = 'sflag constant byte address 0x0 - dummy sync flag']
  #allocation11 [shape = 's32[]', space=sflag, size = 0x4, offset = 0, fixed_abs, tag = 'sflag constant byte address 0x0 - dummy sync flag']
  #allocation12 [shape = 's32[]', space=sflag, size = 0x4, offset = 0, fixed_abs, tag = 'sflag constant byte address 0x0 - dummy sync flag']
  #allocation13 [shape = 's32[]', space=sflag, size = 0x4, offset = 0, fixed_abs, tag = 'sflag constant byte address 0x0 - dummy sync flag']
  #allocation14 [shape = 's32[]', space=sflag, size = 0x4, offset = 0, fixed_abs, tag = 'sflag constant byte address 0x0 - dummy sync flag']
  #allocation15 [shape = 's32[]', space=sflag, size = 0x4, offset = 0, fixed_abs, tag = 'sflag constant byte address 0x0 - dummy sync flag']
  #allocation16 [shape = 's32[]', space=sflag, size = 0x4, offset = 0, fixed_abs, tag = 'sflag constant byte address 0x0 - dummy sync flag']
  #allocation17 [shape = 's32[]', space=sflag, size = 0x4, offset = 0, fixed_abs, tag = 'sflag constant byte address 0x0 - dummy sync flag']
  #allocation18 [shape = 's32[]', space=sflag, size = 0x4, offset = 0, fixed_abs, tag = 'sflag constant byte address 0x0 - dummy sync flag']
  #allocation19 [shape = 's32[]', space=sflag, size = 0x4, offset = 0, fixed_abs, tag = 'sflag constant byte address 0x0 - dummy sync flag']
  #allocation20 [shape = 's32[]', space=sflag, size = 0x4, offset = 0, fixed_abs, tag = 'sflag constant byte address 0x0 - dummy sync flag']
  #allocation21 [shape = 's32[]', space=sflag, size = 0x4, offset = 0, fixed_abs, tag = 'sflag constant byte address 0x0 - dummy sync flag']
  #allocation22 [shape = 's32[]', space=sflag, size = 0x4, offset = 0, fixed_abs, tag = 'sflag constant byte address 0x0 - dummy sync flag']
  #allocation23 [shape = 's32[]', space=sflag, size = 0x4, offset = 0, fixed_abs, tag = 'sflag constant byte address 0x0 - dummy sync flag']
  %s0 = inlined_call_operand.vmem [shape: s32[16], index: 0, kind: input, shape index: {}]
  %s1 = inlined_call_operand.hbm [shape: f32[32,768], index: 1, kind: input, shape index: {}]
  %s2 = inlined_call_operand.hbm [shape: f32[768,128], index: 2, kind: input, shape index: {}]
  %s3 = inlined_call_operand.vmem [shape: f32[1,128], index: 3, kind: input, shape index: {}]
  %s4 = inlined_call_operand.vmem [shape: f32[16,1], index: 4, kind: input, shape index: {}]
  %s5 = inlined_call_operand.vmem [shape: f32[16,128], index: 5, kind: output, shape index: {}]
  %s6 = sld [smem:[#allocation0]]
  $region26: #{full_conv_model_forward.1} parent=0
    _
  %s8 = ssub.s32 1, %s6
  %s9 = scalar_select 0, %s8, %s6
  %s10 = sshll.u32 %s0, 4
  %s11 = int_to_ptr.vmem [resolvable:$true] %s10
  %13 = dma.vmem_to_smem %s11, 16, [#allocation5], [#allocation4]
  %14 = dma.done [#allocation4], 16
  %15 = sfence
  $region1: #{full_conv_model_forward.1} parent=0
    #allocation6 [shape = 'u8[393216]{0}', space=vmem, size = 0x60000, scoped, tag = 'input window, operand 2, single buffered']
    #allocation7 [shape = 's32[1]{0}', space=sflag, size = 0x4, scoped, tag = 'scoped memory for full_conv_model_forward.1']
    %16 = vsyncpa [#allocation7], 0
    // Predicated region
    $region2: #{full_conv_model_forward.1} parent=1 // pred_check
      _
    $region3: #{full_conv_model_forward.1} parent=1 // pred_check_branch
      %18 = sbr.rel (0) target = $region5
    $region4: #{full_conv_model_forward.1} parent=1 // pred_region
      %s20 = ssub.s32 12288, 12288
      %21 = vsyncadd [#allocation7], %s20
      %s22 = sshll.u32 [#allocation6], 4
      %s23 = int_to_ptr.vmem [resolvable:$true] %s22
      %28 = dma.hbm_to_vmem [thread:$0]  %s2, 12288, %s23, [#allocation7], 128, 128, 8
    $region5: #{full_conv_model_forward.1} parent=1 // pred_fallthru
      _
    // Predicated region
    $region6: #{full_conv_model_forward.1} parent=1 // pred_check
      _
    $region7: #{full_conv_model_forward.1} parent=1 // pred_check_branch
      %30 = sbr.rel (0) target = $region9
    $region8: #{full_conv_model_forward.1} parent=1 // pred_region
      _
    $region9: #{full_conv_model_forward.1} parent=1 // pred_fallthru
      _
    // Predicated region
    $region10: #{full_conv_model_forward.1} parent=1 // pred_check
      _
    $region11: #{full_conv_model_forward.1} parent=1 // pred_check_branch
      %32 = sbr.rel (0) target = $region13
    $region12: #{full_conv_model_forward.1} parent=1 // pred_region
      _
    $region13: #{full_conv_model_forward.1} parent=1 // pred_fallthru
      _
    // Predicated region
    $region14: #{full_conv_model_forward.1} parent=1 // pred_check
      _
    $region15: #{full_conv_model_forward.1} parent=1 // pred_check_branch
      %34 = sbr.rel (0) target = $region17
    $region16: #{full_conv_model_forward.1} parent=1 // pred_region
      %35 = dma.done [#allocation7], 12288
    $region17: #{full_conv_model_forward.1} parent=1 // pred_fallthru
      _
    %s36 = smul.u32 0, 16
    %s37 = sld [smem:[#allocation5 + %s36]]
    %s38 = sshrl.u32 %s37, 3
    %s39 = sand.u32 %s37, 7
    %s40 = smul.u32 %s38, 48
    %s41 = sadd.s32 %s39, %s40
    %s42 = smul.addr %s41, 16
    %s43 = scalar_lea.hbm %s1, %s42
    %s45 = sshll.u32 [#allocation2], 4
    %s46 = int_to_ptr.vmem [resolvable:$true] %s45
    %48 = dma.hbm_to_vmem [thread:$0]  %s43, 96, %s46, [#allocation3], 128, 128, 1
    %s49 = sadd.s32 %s36, 1
    %s50 = sld [smem:[#allocation5 + %s49]]
    %s51 = sshrl.u32 %s50, 3
    %s52 = sand.u32 %s50, 7
    %s53 = smul.u32 %s51, 48
    %s54 = sadd.s32 %s52, %s53
    %s55 = smul.addr %s54, 16
    %s56 = scalar_lea.hbm %s1, %s55
    %s57 = scalar_lea.vmem [#allocation2], 1
    %s58 = scalar_lea.sflag [#allocation3], 1
    %s60 = sshll.u32 %s57, 4
    %s61 = int_to_ptr.vmem [resolvable:$true] %s60
    %63 = dma.hbm_to_vmem [thread:$0]  %s56, 96, %s61, %s58, 128, 128, 1
    %s64 = sadd.s32 %s36, 2
    %s65 = sld [smem:[#allocation5 + %s64]]
    %s66 = sshrl.u32 %s65, 3
    %s67 = sand.u32 %s65, 7
    %s68 = smul.u32 %s66, 48
    %s69 = sadd.s32 %s67, %s68
    %s70 = smul.addr %s69, 16
    %s71 = scalar_lea.hbm %s1, %s70
    %s72 = scalar_lea.vmem [#allocation2], 2
    %s73 = scalar_lea.sflag [#allocation3], 2
    %s75 = sshll.u32 %s72, 4
    %s76 = int_to_ptr.vmem [resolvable:$true] %s75
    %78 = dma.hbm_to_vmem [thread:$0]  %s71, 96, %s76, %s73, 128, 128, 1
    %s79 = sadd.s32 %s36, 3
    %s80 = sld [smem:[#allocation5 + %s79]]
    %s81 = sshrl.u32 %s80, 3
    %s82 = sand.u32 %s80, 7
    %s83 = smul.u32 %s81, 48
    %s84 = sadd.s32 %s82, %s83
    %s85 = smul.addr %s84, 16
    %s86 = scalar_lea.hbm %s1, %s85
    %s87 = scalar_lea.vmem [#allocation2], 3
    %s88 = scalar_lea.sflag [#allocation3], 3
    %s90 = sshll.u32 %s87, 4
    %s91 = int_to_ptr.vmem [resolvable:$true] %s90
    %93 = dma.hbm_to_vmem [thread:$0]  %s86, 96, %s91, %s88, 128, 128, 1
    %s94 = sadd.s32 %s36, 4
    %s95 = sld [smem:[#allocation5 + %s94]]
    %s96 = sshrl.u32 %s95, 3
    %s97 = sand.u32 %s95, 7
    %s98 = smul.u32 %s96, 48
    %s99 = sadd.s32 %s97, %s98
    %s100 = smul.addr %s99, 16
    %s101 = scalar_lea.hbm %s1, %s100
    %s102 = scalar_lea.vmem [#allocation2], 4
    %s103 = scalar_lea.sflag [#allocation3], 4
    %s105 = sshll.u32 %s102, 4
    %s106 = int_to_ptr.vmem [resolvable:$true] %s105
    %108 = dma.hbm_to_vmem [thread:$0]  %s101, 96, %s106, %s103, 128, 128, 1
    %s109 = sadd.s32 %s36, 5
    %s110 = sld [smem:[#allocation5 + %s109]]
    %s111 = sshrl.u32 %s110, 3
    %s112 = sand.u32 %s110, 7
    %s113 = smul.u32 %s111, 48
    %s114 = sadd.s32 %s112, %s113
    %s115 = smul.addr %s114, 16
    %s116 = scalar_lea.hbm %s1, %s115
    %s117 = scalar_lea.vmem [#allocation2], 5
    %s118 = scalar_lea.sflag [#allocation3], 5
    %s120 = sshll.u32 %s117, 4
    %s121 = int_to_ptr.vmem [resolvable:$true] %s120
    %123 = dma.hbm_to_vmem [thread:$0]  %s116, 96, %s121, %s118, 128, 128, 1
    %s124 = sadd.s32 %s36, 6
    %s125 = sld [smem:[#allocation5 + %s124]]
    %s126 = sshrl.u32 %s125, 3
    %s127 = sand.u32 %s125, 7
    %s128 = smul.u32 %s126, 48
    %s129 = sadd.s32 %s127, %s128
    %s130 = smul.addr %s129, 16
    %s131 = scalar_lea.hbm %s1, %s130
    %s132 = scalar_lea.vmem [#allocation2], 6
    %s133 = scalar_lea.sflag [#allocation3], 6
    %s135 = sshll.u32 %s132, 4
    %s136 = int_to_ptr.vmem [resolvable:$true] %s135
    %138 = dma.hbm_to_vmem [thread:$0]  %s131, 96, %s136, %s133, 128, 128, 1
    %s139 = sadd.s32 %s36, 7
    %s140 = sld [smem:[#allocation5 + %s139]]
    %s141 = sshrl.u32 %s140, 3
    %s142 = sand.u32 %s140, 7
    %s143 = smul.u32 %s141, 48
    %s144 = sadd.s32 %s142, %s143
    %s145 = smul.addr %s144, 16
    %s146 = scalar_lea.hbm %s1, %s145
    %s147 = scalar_lea.vmem [#allocation2], 7
    %s148 = scalar_lea.sflag [#allocation3], 7
    %s150 = sshll.u32 %s147, 4
    %s151 = int_to_ptr.vmem [resolvable:$true] %s150
    %153 = dma.hbm_to_vmem [thread:$0]  %s146, 96, %s151, %s148, 128, 128, 1
    %s154 = sadd.s32 %s36, 8
    %s155 = sld [smem:[#allocation5 + %s154]]
    %s156 = sshrl.u32 %s155, 3
    %s157 = sand.u32 %s155, 7
    %s158 = smul.u32 %s156, 48
    %s159 = sadd.s32 %s157, %s158
    %s160 = smul.addr %s159, 16
    %s161 = scalar_lea.hbm %s1, %s160
    %s162 = scalar_lea.vmem [#allocation2], 48
    %s163 = scalar_lea.sflag [#allocation3], 8
    %s165 = sshll.u32 %s162, 4
    %s166 = int_to_ptr.vmem [resolvable:$true] %s165
    %168 = dma.hbm_to_vmem [thread:$0]  %s161, 96, %s166, %s163, 128, 128, 1
    %s169 = sadd.s32 %s36, 9
    %s170 = sld [smem:[#allocation5 + %s169]]
    %s171 = sshrl.u32 %s170, 3
    %s172 = sand.u32 %s170, 7
    %s173 = smul.u32 %s171, 48
    %s174 = sadd.s32 %s172, %s173
    %s175 = smul.addr %s174, 16
    %s176 = scalar_lea.hbm %s1, %s175
    %s177 = scalar_lea.vmem [#allocation2], 49
    %s178 = scalar_lea.sflag [#allocation3], 9
    %s180 = sshll.u32 %s177, 4
    %s181 = int_to_ptr.vmem [resolvable:$true] %s180
    %183 = dma.hbm_to_vmem [thread:$0]  %s176, 96, %s181, %s178, 128, 128, 1
    %s184 = sadd.s32 %s36, 10
    %s185 = sld [smem:[#allocation5 + %s184]]
    %s186 = sshrl.u32 %s185, 3
    %s187 = sand.u32 %s185, 7
    %s188 = smul.u32 %s186, 48
    %s189 = sadd.s32 %s187, %s188
    %s190 = smul.addr %s189, 16
    %s191 = scalar_lea.hbm %s1, %s190
    %s192 = scalar_lea.vmem [#allocation2], 50
    %s193 = scalar_lea.sflag [#allocation3], 10
    %s195 = sshll.u32 %s192, 4
    %s196 = int_to_ptr.vmem [resolvable:$true] %s195
    %198 = dma.hbm_to_vmem [thread:$0]  %s191, 96, %s196, %s193, 128, 128, 1
    %s199 = sadd.s32 %s36, 11
    %s200 = sld [smem:[#allocation5 + %s199]]
    %s201 = sshrl.u32 %s200, 3
    %s202 = sand.u32 %s200, 7
    %s203 = smul.u32 %s201, 48
    %s204 = sadd.s32 %s202, %s203
    %s205 = smul.addr %s204, 16
    %s206 = scalar_lea.hbm %s1, %s205
    %s207 = scalar_lea.vmem [#allocation2], 51
    %s208 = scalar_lea.sflag [#allocation3], 11
    %s210 = sshll.u32 %s207, 4
    %s211 = int_to_ptr.vmem [resolvable:$true] %s210
    %213 = dma.hbm_to_vmem [thread:$0]  %s206, 96, %s211, %s208, 128, 128, 1
    %s214 = sadd.s32 %s36, 12
    %s215 = sld [smem:[#allocation5 + %s214]]
    %s216 = sshrl.u32 %s215, 3
    %s217 = sand.u32 %s215, 7
    %s218 = smul.u32 %s216, 48
    %s219 = sadd.s32 %s217, %s218
    %s220 = smul.addr %s219, 16
    %s221 = scalar_lea.hbm %s1, %s220
    %s222 = scalar_lea.vmem [#allocation2], 52
    %s223 = scalar_lea.sflag [#allocation3], 12
    %s225 = sshll.u32 %s222, 4
    %s226 = int_to_ptr.vmem [resolvable:$true] %s225
    %228 = dma.hbm_to_vmem [thread:$0]  %s221, 96, %s226, %s223, 128, 128, 1
    %s229 = sadd.s32 %s36, 13
    %s230 = sld [smem:[#allocation5 + %s229]]
    %s231 = sshrl.u32 %s230, 3
    %s232 = sand.u32 %s230, 7
    %s233 = smul.u32 %s231, 48
    %s234 = sadd.s32 %s232, %s233
    %s235 = smul.addr %s234, 16
    %s236 = scalar_lea.hbm %s1, %s235
    %s237 = scalar_lea.vmem [#allocation2], 53
    %s238 = scalar_lea.sflag [#allocation3], 13
    %s240 = sshll.u32 %s237, 4
    %s241 = int_to_ptr.vmem [resolvable:$true] %s240
    %243 = dma.hbm_to_vmem [thread:$0]  %s236, 96, %s241, %s238, 128, 128, 1
    %s244 = sadd.s32 %s36, 14
    %s245 = sld [smem:[#allocation5 + %s244]]
    %s246 = sshrl.u32 %s245, 3
    %s247 = sand.u32 %s245, 7
    %s248 = smul.u32 %s246, 48
    %s249 = sadd.s32 %s247, %s248
    %s250 = smul.addr %s249, 16
    %s251 = scalar_lea.hbm %s1, %s250
    %s252 = scalar_lea.vmem [#allocation2], 54
    %s253 = scalar_lea.sflag [#allocation3], 14
    %s255 = sshll.u32 %s252, 4
    %s256 = int_to_ptr.vmem [resolvable:$true] %s255
    %258 = dma.hbm_to_vmem [thread:$0]  %s251, 96, %s256, %s253, 128, 128, 1
    %s259 = sadd.s32 %s36, 15
    %s260 = sld [smem:[#allocation5 + %s259]]
    %s261 = sshrl.u32 %s260, 3
    %s262 = sand.u32 %s260, 7
    %s263 = smul.u32 %s261, 48
    %s264 = sadd.s32 %s262, %s263
    %s265 = smul.addr %s264, 16
    %s266 = scalar_lea.hbm %s1, %s265
    %s267 = scalar_lea.vmem [#allocation2], 55
    %s268 = scalar_lea.sflag [#allocation3], 15
    %s270 = sshll.u32 %s267, 4
    %s271 = int_to_ptr.vmem [resolvable:$true] %s270
    %273 = dma.hbm_to_vmem [thread:$0]  %s266, 96, %s271, %s268, 128, 128, 1
    %s274 = smul.u32 1, 6
    %s275 = sshll.u32 %s274, 4
    %276 = dma.done [#allocation3], %s275
    %s277 = sshll.u32 %s274, 4
    %278 = dma.done %s58, %s277
    %s279 = sshll.u32 %s274, 4
    %280 = dma.done %s73, %s279
    %s281 = sshll.u32 %s274, 4
    %282 = dma.done %s88, %s281
    %s283 = sshll.u32 %s274, 4
    %284 = dma.done %s103, %s283
    %s285 = sshll.u32 %s274, 4
    %286 = dma.done %s118, %s285
    %s287 = sshll.u32 %s274, 4
    %288 = dma.done %s133, %s287
    %s289 = sshll.u32 %s274, 4
    %290 = dma.done %s148, %s289
    %s291 = sshll.u32 %s274, 4
    %292 = dma.done %s163, %s291
    %s293 = sshll.u32 %s274, 4
    %294 = dma.done %s178, %s293
    %s295 = sshll.u32 %s274, 4
    %296 = dma.done %s193, %s295
    %s297 = sshll.u32 %s274, 4
    %298 = dma.done %s208, %s297
    %s299 = sshll.u32 %s274, 4
    %300 = dma.done %s223, %s299
    %s301 = sshll.u32 %s274, 4
    %302 = dma.done %s238, %s301
    %s303 = sshll.u32 %s274, 4
    %304 = dma.done %s253, %s303
    %s305 = sshll.u32 %s274, 4
    %306 = dma.done %s268, %s305
    %v307 = vld [vmem:[#allocation2] sm:$0xff]
    %v308 = vld [vmem:[#allocation2 + $0x8] sm:$0xff]
    %v309 = vld [vmem:[#allocation2 + $0x10] sm:$0xff]
    %v310 = vld [vmem:[#allocation2 + $0x18] sm:$0xff]
    %v311 = vld [vmem:[#allocation2 + $0x20] sm:$0xff]
    %v312 = vld [vmem:[#allocation2 + $0x28] sm:$0xff]
    %v313 = vld [vmem:[#allocation2 + $0x30] sm:$0xff]
    %v314 = vld [vmem:[#allocation2 + $0x38] sm:$0xff]
    %v315 = vld [vmem:[#allocation2 + $0x40] sm:$0xff]
    %v316 = vld [vmem:[#allocation2 + $0x48] sm:$0xff]
    %v317 = vld [vmem:[#allocation2 + $0x50] sm:$0xff]
    %v318 = vld [vmem:[#allocation2 + $0x58] sm:$0xff]
    %v319 = vld [vmem:[#allocation6] sm:$0xff]
    %v320 = vld [vmem:[#allocation6 + $0x8] sm:$0xff]
    %v321 = vld [vmem:[#allocation6 + $0x10] sm:$0xff]
    %v322 = vld [vmem:[#allocation6 + $0x18] sm:$0xff]
    %v323 = vld [vmem:[#allocation6 + $0x20] sm:$0xff]
    %v324 = vld [vmem:[#allocation6 + $0x28] sm:$0xff]
    %v325 = vld [vmem:[#allocation6 + $0x30] sm:$0xff]
    %v326 = vld [vmem:[#allocation6 + $0x38] sm:$0xff]
    %v327 = vld [vmem:[#allocation6 + $0x40] sm:$0xff]
    %v328 = vld [vmem:[#allocation6 + $0x48] sm:$0xff]
    %v329 = vld [vmem:[#allocation6 + $0x50] sm:$0xff]
    %v330 = vld [vmem:[#allocation6 + $0x58] sm:$0xff]
    %v331 = vld [vmem:[#allocation6 + $0x60] sm:$0xff]
    %v332 = vld [vmem:[#allocation6 + $0x68] sm:$0xff]
    %v333 = vld [vmem:[#allocation6 + $0x70] sm:$0xff]
    %v334 = vld [vmem:[#allocation6 + $0x78] sm:$0xff]
    %v335 = vld [vmem:[#allocation6 + $0x80] sm:$0xff]
    %v336 = vld [vmem:[#allocation6 + $0x88] sm:$0xff]
    %v337 = vld [vmem:[#allocation6 + $0x90] sm:$0xff]
    %v338 = vld [vmem:[#allocation6 + $0x98] sm:$0xff]
    %v339 = vld [vmem:[#allocation6 + $0xa0] sm:$0xff]
    %v340 = vld [vmem:[#allocation6 + $0xa8] sm:$0xff]
    %v341 = vld [vmem:[#allocation6 + $0xb0] sm:$0xff]
    %v342 = vld [vmem:[#allocation6 + $0xb8] sm:$0xff]
    %v343 = vld [vmem:[#allocation6 + $0xc0] sm:$0xff]
    %v344 = vld [vmem:[#allocation6 + $0xc8] sm:$0xff]
    %v345 = vld [vmem:[#allocation6 + $0xd0] sm:$0xff]
    %v346 = vld [vmem:[#allocation6 + $0xd8] sm:$0xff]
    %v347 = vld [vmem:[#allocation6 + $0xe0] sm:$0xff]
    %v348 = vld [vmem:[#allocation6 + $0xe8] sm:$0xff]
    %v349 = vld [vmem:[#allocation6 + $0xf0] sm:$0xff]
    %v350 = vld [vmem:[#allocation6 + $0xf8] sm:$0xff]
    %v351 = vld [vmem:[#allocation6 + $0x100] sm:$0xff]
    %v352 = vld [vmem:[#allocation6 + $0x108] sm:$0xff]
    %v353 = vld [vmem:[#allocation6 + $0x110] sm:$0xff]
    %v354 = vld [vmem:[#allocation6 + $0x118] sm:$0xff]
    %v355 = vld [vmem:[#allocation6 + $0x120] sm:$0xff]
    %v356 = vld [vmem:[#allocation6 + $0x128] sm:$0xff]
    %v357 = vld [vmem:[#allocation6 + $0x130] sm:$0xff]
    %v358 = vld [vmem:[#allocation6 + $0x138] sm:$0xff]
    %v359 = vld [vmem:[#allocation6 + $0x140] sm:$0xff]
    %v360 = vld [vmem:[#allocation6 + $0x148] sm:$0xff]
    %v361 = vld [vmem:[#allocation6 + $0x150] sm:$0xff]
    %v362 = vld [vmem:[#allocation6 + $0x158] sm:$0xff]
    %v363 = vld [vmem:[#allocation6 + $0x160] sm:$0xff]
    %v364 = vld [vmem:[#allocation6 + $0x168] sm:$0xff]
    %v365 = vld [vmem:[#allocation6 + $0x170] sm:$0xff]
    %v366 = vld [vmem:[#allocation6 + $0x178] sm:$0xff]
    %v367 = vld [vmem:[#allocation6 + $0x180] sm:$0xff]
    %v368 = vld [vmem:[#allocation6 + $0x188] sm:$0xff]
    %v369 = vld [vmem:[#allocation6 + $0x190] sm:$0xff]
    %v370 = vld [vmem:[#allocation6 + $0x198] sm:$0xff]
    %v371 = vld [vmem:[#allocation6 + $0x1a0] sm:$0xff]
    %v372 = vld [vmem:[#allocation6 + $0x1a8] sm:$0xff]
    %v373 = vld [vmem:[#allocation6 + $0x1b0] sm:$0xff]
    %v374 = vld [vmem:[#allocation6 + $0x1b8] sm:$0xff]
    %v375 = vld [vmem:[#allocation6 + $0x1c0] sm:$0xff]
    %v376 = vld [vmem:[#allocation6 + $0x1c8] sm:$0xff]
    %v377 = vld [vmem:[#allocation6 + $0x1d0] sm:$0xff]
    %v378 = vld [vmem:[#allocation6 + $0x1d8] sm:$0xff]
    %v379 = vld [vmem:[#allocation6 + $0x1e0] sm:$0xff]
    %v380 = vld [vmem:[#allocation6 + $0x1e8] sm:$0xff]
    %v381 = vld [vmem:[#allocation6 + $0x1f0] sm:$0xff]
    %v382 = vld [vmem:[#allocation6 + $0x1f8] sm:$0xff]
    %v383 = vld [vmem:[#allocation6 + $0x200] sm:$0xff]
    %v384 = vld [vmem:[#allocation6 + $0x208] sm:$0xff]
    %v385 = vld [vmem:[#allocation6 + $0x210] sm:$0xff]
    %v386 = vld [vmem:[#allocation6 + $0x218] sm:$0xff]
    %v387 = vld [vmem:[#allocation6 + $0x220] sm:$0xff]
    %v388 = vld [vmem:[#allocation6 + $0x228] sm:$0xff]
    %v389 = vld [vmem:[#allocation6 + $0x230] sm:$0xff]
    %v390 = vld [vmem:[#allocation6 + $0x238] sm:$0xff]
    %v391 = vld [vmem:[#allocation6 + $0x240] sm:$0xff]
    %v392 = vld [vmem:[#allocation6 + $0x248] sm:$0xff]
    %v393 = vld [vmem:[#allocation6 + $0x250] sm:$0xff]
    %v394 = vld [vmem:[#allocation6 + $0x258] sm:$0xff]
    %v395 = vld [vmem:[#allocation6 + $0x260] sm:$0xff]
    %v396 = vld [vmem:[#allocation6 + $0x268] sm:$0xff]
    %v397 = vld [vmem:[#allocation6 + $0x270] sm:$0xff]
    %v398 = vld [vmem:[#allocation6 + $0x278] sm:$0xff]
    %v399 = vld [vmem:[#allocation6 + $0x280] sm:$0xff]
    %v400 = vld [vmem:[#allocation6 + $0x288] sm:$0xff]
    %v401 = vld [vmem:[#allocation6 + $0x290] sm:$0xff]
    %v402 = vld [vmem:[#allocation6 + $0x298] sm:$0xff]
    %v403 = vld [vmem:[#allocation6 + $0x2a0] sm:$0xff]
    %v404 = vld [vmem:[#allocation6 + $0x2a8] sm:$0xff]
    %v405 = vld [vmem:[#allocation6 + $0x2b0] sm:$0xff]
    %v406 = vld [vmem:[#allocation6 + $0x2b8] sm:$0xff]
    %v407 = vld [vmem:[#allocation6 + $0x2c0] sm:$0xff]
    %v408 = vld [vmem:[#allocation6 + $0x2c8] sm:$0xff]
    %v409 = vld [vmem:[#allocation6 + $0x2d0] sm:$0xff]
    %v410 = vld [vmem:[#allocation6 + $0x2d8] sm:$0xff]
    %v411 = vld [vmem:[#allocation6 + $0x2e0] sm:$0xff]
    %v412 = vld [vmem:[#allocation6 + $0x2e8] sm:$0xff]
    %v413 = vld [vmem:[#allocation6 + $0x2f0] sm:$0xff]
    %v414 = vld [vmem:[#allocation6 + $0x2f8] sm:$0xff]
    %v415 = vld [vmem:[%s3] sm:$0x1]
    %v417 = vlaneseq
    %v418 = vshrl.u32 %v417, 7
    %v419 = vsub.s32 0, %v418
    %v420 = vrot.slane %v415, %v419
    %422 = vmatprep.subr.mxu0 0.0
    %423 = vmatpush1.msra.mxu0 %v319
    %424 = vmatprep.subr.mxu0 0.0
    %425 = vmatpush1.msra.mxu0 %v320
    %426 = vmatprep.subr.mxu0 0.0
    %427 = vmatpush1.msra.mxu0 %v321
    %428 = vmatprep.subr.mxu0 0.0
    %429 = vmatpush1.msra.mxu0 %v322
    %430 = vmatprep.subr.mxu0 0.0
    %431 = vmatpush1.msra.mxu0 %v323
    %432 = vmatprep.subr.mxu0 0.0
    %433 = vmatpush1.msra.mxu0 %v324
    %434 = vmatprep.subr.mxu0 0.0
    %435 = vmatpush1.msra.mxu0 %v325
    %436 = vmatprep.subr.mxu0 0.0
    %437 = vmatpush1.msra.mxu0 %v326
    %438 = vmatprep.subr.mxu0 0.0
    %439 = vmatpush1.msra.mxu0 %v327
    %440 = vmatprep.subr.mxu0 0.0
    %441 = vmatpush1.msra.mxu0 %v328
    %442 = vmatprep.subr.mxu0 0.0
    %443 = vmatpush1.msra.mxu0 %v329
    %444 = vmatprep.subr.mxu0 0.0
    %445 = vmatpush1.msra.mxu0 %v330
    %446 = vmatprep.subr.mxu0 0.0
    %447 = vmatpush1.msra.mxu0 %v331
    %448 = vmatprep.subr.mxu0 0.0
    %449 = vmatpush1.msra.mxu0 %v332
    %450 = vmatprep.subr.mxu0 0.0
    %451 = vmatpush1.msra.mxu0 %v333
    %452 = vmatprep.subr.mxu0 0.0
    %453 = vmatpush1.msra.mxu0 %v334
    %454 = vmatprep.subr.mxu0 0.0
    %455 = vmatpush1.msra.mxu0 %v335
    %456 = vmatprep.subr.mxu0 0.0
    %457 = vmatpush1.msra.mxu0 %v336
    %458 = vmatprep.subr.mxu0 0.0
    %459 = vmatpush1.msra.mxu0 %v337
    %460 = vmatprep.subr.mxu0 0.0
    %461 = vmatpush1.msra.mxu0 %v338
    %462 = vmatprep.subr.mxu0 0.0
    %463 = vmatpush1.msra.mxu0 %v339
    %464 = vmatprep.subr.mxu0 0.0
    %465 = vmatpush1.msra.mxu0 %v340
    %466 = vmatprep.subr.mxu0 0.0
    %467 = vmatpush1.msra.mxu0 %v341
    %468 = vmatprep.subr.mxu0 0.0
    %469 = vmatpush1.msra.mxu0 %v342
    %470 = vmatprep.subr.mxu0 0.0
    %471 = vmatpush1.msra.mxu0 %v343
    %472 = vmatprep.subr.mxu0 0.0
    %473 = vmatpush1.msra.mxu0 %v344
    %474 = vmatprep.subr.mxu0 0.0
    %475 = vmatpush1.msra.mxu0 %v345
    %476 = vmatprep.subr.mxu0 0.0
    %477 = vmatpush1.msra.mxu0 %v346
    %478 = vmatprep.subr.mxu0 0.0
    %479 = vmatpush1.msra.mxu0 %v347
    %480 = vmatprep.subr.mxu0 0.0
    %481 = vmatpush1.msra.mxu0 %v348
    %482 = vmatprep.subr.mxu0 0.0
    %483 = vmatpush1.msra.mxu0 %v349
    %484 = vmatprep.subr.mxu0 0.0
    %485 = vmatpush1.msra.mxu0 %v350
    %486 = vmatprep.mubr.f32.mxu0 %v308
    %487 = vmatmul.mubr.f32.gmra.mrb[0].mxu0 %v307
    %v488 = vpop.f32.mrb[0].mxu0
    %v489 = vadd.f32 %v420, %v488
    %v490 = vpop.f32.mrb[0].mxu0
    %491 = vmatprep.mubr.f32.mxu0 %v314
    %492 = vmatmul.mubr.f32.gmra.mrb[0].mxu0 %v313
    %v493 = vpop.f32.mrb[0].mxu0
    %v494 = vadd.f32 %v420, %v493
    %v495 = vpop.f32.mrb[0].mxu0
    %496 = vdwg.mxu0
    %497 = vmatprep.subr.mxu0 0.0
    %498 = vmatpush1.msra.mxu0 %v351
    %499 = vmatprep.subr.mxu0 0.0
    %500 = vmatpush1.msra.mxu0 %v352
    %501 = vmatprep.subr.mxu0 0.0
    %502 = vmatpush1.msra.mxu0 %v353
    %503 = vmatprep.subr.mxu0 0.0
    %504 = vmatpush1.msra.mxu0 %v354
    %505 = vmatprep.subr.mxu0 0.0
    %506 = vmatpush1.msra.mxu0 %v355
    %507 = vmatprep.subr.mxu0 0.0
    %508 = vmatpush1.msra.mxu0 %v356
    %509 = vmatprep.subr.mxu0 0.0
    %510 = vmatpush1.msra.mxu0 %v357
    %511 = vmatprep.subr.mxu0 0.0
    %512 = vmatpush1.msra.mxu0 %v358
    %513 = vmatprep.subr.mxu0 0.0
    %514 = vmatpush1.msra.mxu0 %v359
    %515 = vmatprep.subr.mxu0 0.0
    %516 = vmatpush1.msra.mxu0 %v360
    %517 = vmatprep.subr.mxu0 0.0
    %518 = vmatpush1.msra.mxu0 %v361
    %519 = vmatprep.subr.mxu0 0.0
    %520 = vmatpush1.msra.mxu0 %v362
    %521 = vmatprep.subr.mxu0 0.0
    %522 = vmatpush1.msra.mxu0 %v363
    %523 = vmatprep.subr.mxu0 0.0
    %524 = vmatpush1.msra.mxu0 %v364
    %525 = vmatprep.subr.mxu0 0.0
    %526 = vmatpush1.msra.mxu0 %v365
    %527 = vmatprep.subr.mxu0 0.0
    %528 = vmatpush1.msra.mxu0 %v366
    %529 = vmatprep.subr.mxu0 0.0
    %530 = vmatpush1.msra.mxu0 %v367
    %531 = vmatprep.subr.mxu0 0.0
    %532 = vmatpush1.msra.mxu0 %v368
    %533 = vmatprep.subr.mxu0 0.0
    %534 = vmatpush1.msra.mxu0 %v369
    %535 = vmatprep.subr.mxu0 0.0
    %536 = vmatpush1.msra.mxu0 %v370
    %537 = vmatprep.subr.mxu0 0.0
    %538 = vmatpush1.msra.mxu0 %v371
    %539 = vmatprep.subr.mxu0 0.0
    %540 = vmatpush1.msra.mxu0 %v372
    %541 = vmatprep.subr.mxu0 0.0
    %542 = vmatpush1.msra.mxu0 %v373
    %543 = vmatprep.subr.mxu0 0.0
    %544 = vmatpush1.msra.mxu0 %v374
    %545 = vmatprep.subr.mxu0 0.0
    %546 = vmatpush1.msra.mxu0 %v375
    %547 = vmatprep.subr.mxu0 0.0
    %548 = vmatpush1.msra.mxu0 %v376
    %549 = vmatprep.subr.mxu0 0.0
    %550 = vmatpush1.msra.mxu0 %v377
    %551 = vmatprep.subr.mxu0 0.0
    %552 = vmatpush1.msra.mxu0 %v378
    %553 = vmatprep.subr.mxu0 0.0
    %554 = vmatpush1.msra.mxu0 %v379
    %555 = vmatprep.subr.mxu0 0.0
    %556 = vmatpush1.msra.mxu0 %v380
    %557 = vmatprep.subr.mxu0 0.0
    %558 = vmatpush1.msra.mxu0 %v381
    %559 = vmatprep.subr.mxu0 0.0
    %560 = vmatpush1.msra.mxu0 %v382
    %561 = vmatprep.mubr.f32.mxu0 %v310
    %562 = vmatmul.mubr.f32.gmra.mrb[0].mxu0 %v309
    %v563 = vpop.f32.mrb[0].mxu0
    %v564 = vadd.f32 %v489, %v563
    %v565 = vpop.f32.mrb[0].mxu0
    %566 = vmatprep.mubr.f32.mxu0 %v316
    %567 = vmatmul.mubr.f32.gmra.mrb[0].mxu0 %v315
    %v568 = vpop.f32.mrb[0].mxu0
    %v569 = vadd.f32 %v494, %v568
    %v570 = vpop.f32.mrb[0].mxu0
    %571 = vdwg.mxu0
    %572 = vmatprep.subr.mxu0 0.0
    %573 = vmatpush1.msra.mxu0 %v383
    %574 = vmatprep.subr.mxu0 0.0
    %575 = vmatpush1.msra.mxu0 %v384
    %576 = vmatprep.subr.mxu0 0.0
    %577 = vmatpush1.msra.mxu0 %v385
    %578 = vmatprep.subr.mxu0 0.0
    %579 = vmatpush1.msra.mxu0 %v386
    %580 = vmatprep.subr.mxu0 0.0
    %581 = vmatpush1.msra.mxu0 %v387
    %582 = vmatprep.subr.mxu0 0.0
    %583 = vmatpush1.msra.mxu0 %v388
    %584 = vmatprep.subr.mxu0 0.0
    %585 = vmatpush1.msra.mxu0 %v389
    %586 = vmatprep.subr.mxu0 0.0
    %587 = vmatpush1.msra.mxu0 %v390
    %588 = vmatprep.subr.mxu0 0.0
    %589 = vmatpush1.msra.mxu0 %v391
    %590 = vmatprep.subr.mxu0 0.0
    %591 = vmatpush1.msra.mxu0 %v392
    %592 = vmatprep.subr.mxu0 0.0
    %593 = vmatpush1.msra.mxu0 %v393
    %594 = vmatprep.subr.mxu0 0.0
    %595 = vmatpush1.msra.mxu0 %v394
    %596 = vmatprep.subr.mxu0 0.0
    %597 = vmatpush1.msra.mxu0 %v395
    %598 = vmatprep.subr.mxu0 0.0
    %599 = vmatpush1.msra.mxu0 %v396
    %600 = vmatprep.subr.mxu0 0.0
    %601 = vmatpush1.msra.mxu0 %v397
    %602 = vmatprep.subr.mxu0 0.0
    %603 = vmatpush1.msra.mxu0 %v398
    %604 = vmatprep.subr.mxu0 0.0
    %605 = vmatpush1.msra.mxu0 %v399
    %606 = vmatprep.subr.mxu0 0.0
    %607 = vmatpush1.msra.mxu0 %v400
    %608 = vmatprep.subr.mxu0 0.0
    %609 = vmatpush1.msra.mxu0 %v401
    %610 = vmatprep.subr.mxu0 0.0
    %611 = vmatpush1.msra.mxu0 %v402
    %612 = vmatprep.subr.mxu0 0.0
    %613 = vmatpush1.msra.mxu0 %v403
    %614 = vmatprep.subr.mxu0 0.0
    %615 = vmatpush1.msra.mxu0 %v404
    %616 = vmatprep.subr.mxu0 0.0
    %617 = vmatpush1.msra.mxu0 %v405
    %618 = vmatprep.subr.mxu0 0.0
    %619 = vmatpush1.msra.mxu0 %v406
    %620 = vmatprep.subr.mxu0 0.0
    %621 = vmatpush1.msra.mxu0 %v407
    %622 = vmatprep.subr.mxu0 0.0
    %623 = vmatpush1.msra.mxu0 %v408
    %624 = vmatprep.subr.mxu0 0.0
    %625 = vmatpush1.msra.mxu0 %v409
    %626 = vmatprep.subr.mxu0 0.0
    %627 = vmatpush1.msra.mxu0 %v410
    %628 = vmatprep.subr.mxu0 0.0
    %629 = vmatpush1.msra.mxu0 %v411
    %630 = vmatprep.subr.mxu0 0.0
    %631 = vmatpush1.msra.mxu0 %v412
    %632 = vmatprep.subr.mxu0 0.0
    %633 = vmatpush1.msra.mxu0 %v413
    %634 = vmatprep.subr.mxu0 0.0
    %635 = vmatpush1.msra.mxu0 %v414
    %636 = vmatprep.mubr.f32.mxu0 %v312
    %637 = vmatmul.mubr.f32.gmra.mrb[0].mxu0 %v311
    %v638 = vpop.f32.mrb[0].mxu0
    %v639 = vadd.f32 %v564, %v638
    %v640 = vpop.f32.mrb[0].mxu0
    %641 = vmatprep.mubr.f32.mxu0 %v318
    %642 = vmatmul.mubr.f32.gmra.mrb[0].mxu0 %v317
    %v643 = vpop.f32.mrb[0].mxu0
    %v644 = vadd.f32 %v569, %v643
    %v645 = vpop.f32.mrb[0].mxu0
    %646 = vdwg.mxu0
    %v647 = vld [vmem:[%s4] sm:$0xff]
    %v648 = vld [vmem:[%s4 + $0x8] sm:$0xff]
    %vm649 = vcmp.gt.f32.partialorder %v647, 0.0
    %vm650 = vcmp.gt.f32.partialorder %v648, 0.0
    %v651 = vsel %vm649, 1, 0
    %v652 = vsel %vm650, 1, 0
    %653 = vset.pattern.permute.xlu0 0
    %654 = vperm.xlu0 %653, %v651
    %v655 = vpop.permute.xlu0 %654
    %656 = vset.pattern.permute.xlu0 0
    %657 = vperm.xlu0 %656, %v652
    %v658 = vpop.permute.xlu0 %657
    %vm659 = vcmp.eq.s32.totalorder %v655, 1
    %vm660 = vcmp.eq.s32.totalorder %v658, 1
    %v661 = vsel %vm659, %v639, %v420
    %v662 = vsel %vm660, %v644, %v420
    %663 = vst [vmem:[%s5] sm:$0xff] %v661
    %664 = vst [vmem:[%s5 + $0x8] sm:$0xff] %v662
    // Predicated region
    $region18: #{full_conv_model_forward.1} parent=1 // pred_check
      _
    $region19: #{full_conv_model_forward.1} parent=1 // pred_check_branch
      %666 = sbr.rel (0) target = $region21
    $region20: #{full_conv_model_forward.1} parent=1 // pred_region
      _
    $region21: #{full_conv_model_forward.1} parent=1 // pred_fallthru
      _
    // Predicated region
    $region22: #{full_conv_model_forward.1} parent=1 // pred_check
      _
    $region23: #{full_conv_model_forward.1} parent=1 // pred_check_branch
      %668 = sbr.rel (0) target = $region25
    $region24: #{full_conv_model_forward.1} parent=1 // pred_region
      _
    $region25: #{full_conv_model_forward.1} parent=1 // pred_fallthru
      _
    %669 = vsyncpa [#allocation7], 1
  %670 = vsyncmov [#allocation3]
  %s671 = vpop.sfrf %670
  %p672 = scmp.eq.s32.totalorder %s671, 0
  %p673 = pneg %p672
  %675 = shalt.err (%p673)
  %s676 = scalar_lea.sflag [#allocation3], 1
  %677 = vsyncmov %s676
  %s678 = vpop.sfrf %677
  %p679 = scmp.eq.s32.totalorder %s678, 0
  %p680 = pneg %p679
  %682 = shalt.err (%p680)
  %s683 = scalar_lea.sflag [#allocation3], 2
  %684 = vsyncmov %s683
  %s685 = vpop.sfrf %684
  %p686 = scmp.eq.s32.totalorder %s685, 0
  %p687 = pneg %p686
  %689 = shalt.err (%p687)
  %s690 = scalar_lea.sflag [#allocation3], 3
  %691 = vsyncmov %s690
  %s692 = vpop.sfrf %691
  %p693 = scmp.eq.s32.totalorder %s692, 0
  %p694 = pneg %p693
  %696 = shalt.err (%p694)
  %s697 = scalar_lea.sflag [#allocation3], 4
  %698 = vsyncmov %s697
  %s699 = vpop.sfrf %698
  %p700 = scmp.eq.s32.totalorder %s699, 0
  %p701 = pneg %p700
  %703 = shalt.err (%p701)
  %s704 = scalar_lea.sflag [#allocation3], 5
  %705 = vsyncmov %s704
  %s706 = vpop.sfrf %705
  %p707 = scmp.eq.s32.totalorder %s706, 0
  %p708 = pneg %p707
  %710 = shalt.err (%p708)
  %s711 = scalar_lea.sflag [#allocation3], 6
  %712 = vsyncmov %s711
  %s713 = vpop.sfrf %712
  %p714 = scmp.eq.s32.totalorder %s713, 0
  %p715 = pneg %p714
  %717 = shalt.err (%p715)
  %s718 = scalar_lea.sflag [#allocation3], 7
  %719 = vsyncmov %s718
  %s720 = vpop.sfrf %719
  %p721 = scmp.eq.s32.totalorder %s720, 0
  %p722 = pneg %p721
  %724 = shalt.err (%p722)
  %s725 = scalar_lea.sflag [#allocation3], 8
  %726 = vsyncmov %s725
  %s727 = vpop.sfrf %726
  %p728 = scmp.eq.s32.totalorder %s727, 0
  %p729 = pneg %p728
  %731 = shalt.err (%p729)
  %s732 = scalar_lea.sflag [#allocation3], 9
  %733 = vsyncmov %s732
  %s734 = vpop.sfrf %733
  %p735 = scmp.eq.s32.totalorder %s734, 0
  %p736 = pneg %p735
  %738 = shalt.err (%p736)
  %s739 = scalar_lea.sflag [#allocation3], 10
  %740 = vsyncmov %s739
  %s741 = vpop.sfrf %740
  %p742 = scmp.eq.s32.totalorder %s741, 0
  %p743 = pneg %p742
  %745 = shalt.err (%p743)
  %s746 = scalar_lea.sflag [#allocation3], 11
  %747 = vsyncmov %s746
  %s748 = vpop.sfrf %747
  %p749 = scmp.eq.s32.totalorder %s748, 0
  %p750 = pneg %p749
  %752 = shalt.err (%p750)
  %s753 = scalar_lea.sflag [#allocation3], 12
  %754 = vsyncmov %s753
  %s755 = vpop.sfrf %754
  %p756 = scmp.eq.s32.totalorder %s755, 0
  %p757 = pneg %p756
  %759 = shalt.err (%p757)
  %s760 = scalar_lea.sflag [#allocation3], 13
  %761 = vsyncmov %s760
  %s762 = vpop.sfrf %761
  %p763 = scmp.eq.s32.totalorder %s762, 0
  %p764 = pneg %p763
  %766 = shalt.err (%p764)
  %s767 = scalar_lea.sflag [#allocation3], 14
  %768 = vsyncmov %s767
  %s769 = vpop.sfrf %768
  %p770 = scmp.eq.s32.totalorder %s769, 0
  %p771 = pneg %p770
  %773 = shalt.err (%p771)
  %s774 = scalar_lea.sflag [#allocation3], 15
  %775 = vsyncmov %s774
  %s776 = vpop.sfrf %775
  %p777 = scmp.eq.s32.totalorder %s776, 0
  %p778 = pneg %p777
  %780 = shalt.err (%p778)

</llo_original>
